<compile_context>
chip_gen: v6e
topology: v6e:2x2x1
jax: 0.10.0
libtpu: 0.0.40
codegen_flags: <defaults>
</compile_context>

<pallas_src>
import functools

import numpy as np

import jax
import jax.numpy as jnp
from jax.experimental import pallas as pl
from jax.experimental.pallas import tpu as pltpu


# ----------------------------------------------------------------------------
# Tiling helpers
# ----------------------------------------------------------------------------
def _round_up(v, m):
    return ((v + m - 1) // m) * m


def _largest_divisor_tile(dim, cap, align):
    """Largest multiple of `align` dividing `dim` (dim % align == 0), <= cap."""
    t = max(align, (min(cap, dim) // align) * align)
    while dim % t:
        t -= align
    return t


def _m_tiling(m, cap=256, align=16):
    """(tile, padded) for the row (sublane) dimension of the activation."""
    tm = min(cap, _round_up(m, align))
    return tm, _round_up(m, tm)


# ----------------------------------------------------------------------------
# Pallas kernel: fused matmul + bias + activation
# ----------------------------------------------------------------------------
def _matmul_bias_act_kernel(a_ref, b_ref, bias_ref, o_ref, acc_ref, *, activation):
    """grid = (M_tiles, N_tiles, K_tiles), K (reduction) innermost.

    A resident f32 VMEM scratch accumulates across K; the bf16 output block is
    written once in the last-K epilogue with bias + activation fused (stores
    stay lane-dense because N is padded to a 128 multiple).
    """
    k = pl.program_id(2)

    @pl.when(k == 0)
    def _():
        acc_ref[...] = jnp.zeros_like(acc_ref)

    acc_ref[...] += jnp.dot(a_ref[...], b_ref[...],
                            preferred_element_type=jnp.float32)

    @pl.when(k == pl.num_programs(2) - 1)
    def _():
        out = acc_ref[...] + bias_ref[...]          # (tm, tn) + (1, tn)
        if activation == "relu":
            out = jnp.maximum(out, 0.0)
        elif activation == "sigmoid":
            out = jax.nn.sigmoid(out)
        o_ref[...] = out.astype(o_ref.dtype)


def matmul_bias_act(a, prep, activation=None, n_out=None):
    """a (M, K) @ prepared weight (Kp, Np) + bias, fused activation -> bf16.

    The weight/bias arrive pre-cast / pre-transposed / pre-padded (see
    prepare_params), so only the small activation matrix is padded per call.
    If n_out is None the (lane-dense) padded N width is returned unchanged.
    """
    w, bias = prep["w"], prep["bias"]
    M, K = a.shape
    Kp, Np = w.shape
    assert K <= Kp and bias.shape == (1, Np)

    tm, Mp = _m_tiling(M)
    tk = _largest_divisor_tile(Kp, 2304, 128)
    tn = _largest_divisor_tile(Np, 2048, 128)

    a_p = a.astype(jnp.bfloat16)
    if (Mp, Kp) != (M, K):
        a_p = jnp.pad(a_p, ((0, Mp - M), (0, Kp - K)))

    out = pl.pallas_call(
        functools.partial(_matmul_bias_act_kernel, activation=activation),
        out_shape=jax.ShapeDtypeStruct((Mp, Np), jnp.bfloat16),
        grid=(Mp // tm, Np // tn, Kp // tk),
        in_specs=[
            pl.BlockSpec((tm, tk), lambda m, n, k: (m, k)),
            pl.BlockSpec((tk, tn), lambda m, n, k: (k, n)),
            pl.BlockSpec((1, tn), lambda m, n, k: (0, n)),
        ],
        out_specs=pl.BlockSpec((tm, tn), lambda m, n, k: (m, n)),
        scratch_shapes=[pltpu.VMEM((tm, tn), jnp.float32)],
        compiler_params=pltpu.CompilerParams(
            dimension_semantics=("parallel", "parallel", "arbitrary"),
            vmem_limit_bytes=48 * 1024 * 1024,
        ),
    )(a_p, w, bias)

    if n_out is None:
        n_out = Np
    if (M, n_out) != (Mp, Np):
        out = out[:M, :n_out]
    return out


# ----------------------------------------------------------------------------
# Layer wrappers (NHWC activations, bf16 throughout)
# ----------------------------------------------------------------------------
def conv2d(x, prep, ksize, stride, pad, activation):
    """x: NHWC bf16 (channels may be zero-padded); returns NHWC bf16 with the
    padded (lane-dense) output-channel width."""
    n, h, w, c = x.shape
    # Patch extraction (im2col) is XLA glue; its feature ordering is channel-
    # major (Cin, kh, kw), matching the weight reshape in _prepare_conv.
    patches = jax.lax.conv_general_dilated_patches(
        x, (ksize, ksize), (stride, stride), [(pad, pad), (pad, pad)],
        dimension_numbers=("NHWC", "HWIO", "NHWC"))
    oh, ow = patches.shape[1], patches.shape[2]
    a = patches.reshape(n * oh * ow, c * ksize * ksize)
    y = matmul_bias_act(a, prep, activation)
    return y.reshape(n, oh, ow, y.shape[1])


def maxpool2d(x, ksize=3, stride=2):
    """MaxPool2d(ksize, stride) on NHWC via a pairwise max tree over strided
    slices -- fuses into one XLA pass, no k*k stacked intermediate."""
    n, h, w, c = x.shape
    oh = (h - ksize) // stride + 1
    ow = (w - ksize) // stride + 1
    out = None
    for kh in range(ksize):
        for kw in range(ksize):
            v = jax.lax.slice(
                x, (0, kh, kw, 0),
                (n, kh + (oh - 1) * stride + 1, kw + (ow - 1) * stride + 1, c),
                (1, stride, stride, 1))
            out = v if out is None else jnp.maximum(out, v)
    return out


def adaptive_avgpool2d(x, out_hw=(6, 6)):
    """AdaptiveAvgPool2d((OH, OW)) on NHWC with static bins (plain jnp -- at
    this input the spatial size is 1x1, so this is just a broadcast)."""
    n, h, w, c = x.shape
    oh_n, ow_n = out_hw
    rows = []
    for oh in range(oh_n):
        hs, he = (oh * h) // oh_n, -(-((oh + 1) * h) // oh_n)
        cols = []
        for ow in range(ow_n):
            ws, we = (ow * w) // ow_n, -(-((ow + 1) * w) // ow_n)
            cols.append(jnp.mean(x[:, hs:he, ws:we, :].astype(jnp.float32),
                                 axis=(1, 2)))
        rows.append(jnp.stack(cols, axis=1))
    return jnp.stack(rows, axis=1).astype(x.dtype)      # (N, OH, OW, C)


# ----------------------------------------------------------------------------
# Parameters: PyTorch-layout init + one-time kernel-ready preparation
# ----------------------------------------------------------------------------
def init_params(key, num_classes=2):
    params = {}

    def nrm(k, shape, fan_in):
        return jax.random.normal(k, shape, jnp.float32) * np.sqrt(2.0 / fan_in)

    conv_cfgs = [
        ("conv1", 3, 96, 11),
        ("conv2", 96, 256, 5),
        ("conv3", 256, 384, 3),
        ("conv4", 384, 384, 3),
        ("conv5", 384, 256, 3),
    ]
    for name, cin, cout, k in conv_cfgs:
        key, kw_, kb_ = jax.random.split(key, 3)
        params[name + "_w"] = nrm(kw_, (cout, cin, k, k), cin * k * k)
        params[name + "_b"] = 0.01 * jax.random.normal(kb_, (cout,), jnp.float32)

    fc_cfgs = [
        ("fc1", 256 * 6 * 6, 4096),
        ("fc2", 4096, 4096),
        ("fc3", 4096, num_classes),
    ]
    for name, fin, fout in fc_cfgs:
        key, kw_, kb_ = jax.random.split(key, 3)
        params[name + "_w"] = nrm(kw_, (fout, fin), fin)
        params[name + "_b"] = 0.01 * jax.random.normal(kb_, (fout,), jnp.float32)
    return params


def _prepare_dense(w_out_in, bias):
    """(out, in) weight + (out,) bias -> bf16 (K, N), padded to 128-multiples."""
    w_kn = jnp.transpose(w_out_in)
    k, n = w_kn.shape
    kp, np_ = _round_up(k, 128), _round_up(n, 128)
    w_p = jnp.pad(w_kn.astype(jnp.bfloat16), ((0, kp - k), (0, np_ - n)))
    b_p = jnp.pad(bias.astype(jnp.float32), (0, np_ - n)).reshape(1, np_)
    return {"w": w_p, "bias": b_p}


def _prepare_conv(w, bias, cin_padded=None):
    """(Cout, Cin, kh, kw) -> matmul-ready (Cin_p*kh*kw, Cout_p).  Optional Cin
    zero-padding lets the upstream activation stay channel-padded to 128."""
    cout, cin, kh, kw = w.shape
    if cin_padded is not None and cin_padded != cin:
        w = jnp.pad(w, ((0, 0), (0, cin_padded - cin), (0, 0), (0, 0)))
        cin = cin_padded
    return _prepare_dense(w.reshape(cout, cin * kh * kw), bias)


def prepare_params(params):
    """One-time weight preprocessing, hoisted out of the jitted forward."""
    return {
        "conv1": _prepare_conv(params["conv1_w"], params["conv1_b"]),
        # conv1's 96 output channels stay zero-padded to 128 through the pool,
        # so conv2's input-channel dim is padded to 128 here (zero rows).
        "conv2": _prepare_conv(params["conv2_w"], params["conv2_b"], cin_padded=128),
        "conv3": _prepare_conv(params["conv3_w"], params["conv3_b"]),
        "conv4": _prepare_conv(params["conv4_w"], params["conv4_b"]),
        "conv5": _prepare_conv(params["conv5_w"], params["conv5_b"]),
        "fc1": _prepare_dense(params["fc1_w"], params["fc1_b"]),
        "fc2": _prepare_dense(params["fc2_w"], params["fc2_b"]),
        "fc3": _prepare_dense(params["fc3_w"], params["fc3_b"]),
    }


# ----------------------------------------------------------------------------
# AlexNet forward (mirrors the PyTorch module; inference semantics)
# ----------------------------------------------------------------------------
def alexnet_forward(prep, x, num_classes=2):
    n = x.shape[0]
    x = jnp.transpose(x, (0, 2, 3, 1)).astype(jnp.bfloat16)   # NCHW -> NHWC bf16
    # convolutional stack (bf16 activations; conv1/pool/conv2 keep C padded 128)
    x = conv2d(x, prep["conv1"], 11, 4, 2, "relu")
    x = maxpool2d(x, 3, 2)
    x = conv2d(x, prep["conv2"], 5, 1, 2, "relu")
    x = maxpool2d(x, 3, 2)
    x = conv2d(x, prep["conv3"], 3, 1, 1, "relu")
    x = conv2d(x, prep["conv4"], 3, 1, 1, "relu")
    x = conv2d(x, prep["conv5"], 3, 1, 1, "relu")
    x = maxpool2d(x, 3, 2)
    x = adaptive_avgpool2d(x, (6, 6))                          # (N, 6, 6, 256)
    # flatten in (C, H, W) order, matching torch.flatten(x, 1) on NCHW
    x = jnp.transpose(x, (0, 3, 1, 2)).reshape(n, -1)
    # TODO(synk): nn.Dropout treated as identity (inference semantics).
    x = matmul_bias_act(x, prep["fc1"], "relu")
    x = matmul_bias_act(x, prep["fc2"], "relu")
    x = matmul_bias_act(x, prep["fc3"], "sigmoid", n_out=num_classes)
    return x.astype(jnp.float32)


if __name__ == "__main__":
    key = jax.random.PRNGKey(0)
    key, kx = jax.random.split(key)

    # Small input consistent with the module: batch=2, 3 channels, 64x64.
    # Spatial pipeline: 64 ->conv1-> 15 ->pool-> 7 ->conv2-> 7 ->pool-> 3
    # ->conv3/4/5-> 3 ->pool-> 1 ->adaptive avgpool-> 6x6.
    x = jax.random.normal(kx, (2, 3, 64, 64), jnp.float32)

    params = init_params(key, num_classes=2)
    prepared = prepare_params(params)          # one-time weight prep (hoisted)

    # Cross-check conv1 against XLA's conv: catches any silent mismatch between
    # conv_general_dilated_patches' feature ordering and the weight reshape.
    xb = jnp.transpose(x, (0, 2, 3, 1)).astype(jnp.bfloat16)
    y_pal = conv2d(xb, prepared["conv1"], 11, 4, 2, "relu")[..., :96]
    w_hwio = jnp.transpose(params["conv1_w"], (2, 3, 1, 0)).astype(jnp.bfloat16)
    y_ref = jax.lax.conv_general_dilated(
        xb, w_hwio, (4, 4), [(2, 2), (2, 2)],
        dimension_numbers=("NHWC", "HWIO", "NHWC"),
        preferred_element_type=jnp.float32)
    y_ref = jnp.maximum(y_ref + params["conv1_b"], 0.0)
    np.testing.assert_allclose(np.asarray(y_pal.astype(jnp.float32)),
                               np.asarray(y_ref), rtol=0.1, atol=0.1)

    fwd = jax.jit(alexnet_forward)
    out = jax.block_until_ready(fwd(prepared, x))

    assert out.shape == (2, 2)
    assert bool(jnp.all(jnp.isfinite(out)))
    assert bool(jnp.all((out >= 0.0) & (out <= 1.0)))
    print("KERNEL_OK")
</pallas_src>

<mosaic_0001>
module attributes {stable_mosaic.version = 11 : i64} {
  func.func @_matmul_bias_act_kernel(%arg0: i32, %arg1: i32, %arg2: i32, %arg3: memref<256x384xbf16, #tpu.memory_space<vmem>>, %arg4: memref<384x128xbf16, #tpu.memory_space<vmem>>, %arg5: memref<1x128xf32, #tpu.memory_space<vmem>>, %arg6: memref<256x128xbf16, #tpu.memory_space<vmem>>, %arg7: memref<256x128xf32, #tpu.memory_space<vmem>>) attributes {dimension_semantics = [#tpu.dimension_semantics<parallel>, #tpu.dimension_semantics<parallel>, #tpu.dimension_semantics<arbitrary>], iteration_bounds = array<i64: 2, 1, 1>, scalar_prefetch = 0 : i64, scratch_operands = 1 : i64, tpu.core_type = #tpu.core_type<tc>, window_params = [{transform_indices = @transform_0, window_bounds = array<i64: 256, 384>}, {transform_indices = @transform_1, window_bounds = array<i64: 384, 128>}, {transform_indices = @transform_2, window_bounds = array<i64: 1, 128>}, {transform_indices = @transform_3, window_bounds = array<i64: 256, 128>}]} {
    %c0_i32 = arith.constant 0 : i32
    %0 = arith.cmpi eq, %arg2, %c0_i32 : i32
    %1 = arith.extui %0 : i1 to i32
    %c0_i32_0 = arith.constant 0 : i32
    %2 = arith.cmpi ne, %1, %c0_i32_0 : i32
    scf.if %2 {
      %cst_10 = arith.constant 0.000000e+00 : f32
      %12 = vector.broadcast %cst_10 : f32 to vector<256x128xf32>
      %c0_11 = arith.constant 0 : index
      %c0_12 = arith.constant 0 : index
      %13 = vector.load %arg7[%c0_11, %c0_12] : memref<256x128xf32, #tpu.memory_space<vmem>>, vector<256x128xf32>
      tpu.vector_store %arg7[%c0_11, %c0_12], %12 {strides = array<i32>} : memref<256x128xf32, #tpu.memory_space<vmem>>, vector<256x128xf32>,
    } else {
    }
    %c0 = arith.constant 0 : index
    %c0_1 = arith.constant 0 : index
    %3 = vector.load %arg7[%c0, %c0_1] : memref<256x128xf32, #tpu.memory_space<vmem>>, vector<256x128xf32>
    %c0_2 = arith.constant 0 : index
    %c0_3 = arith.constant 0 : index
    %4 = vector.load %arg3[%c0_2, %c0_3] : memref<256x384xbf16, #tpu.memory_space<vmem>>, vector<256x384xbf16>
    %c0_4 = arith.constant 0 : index
    %c0_5 = arith.constant 0 : index
    %5 = vector.load %arg4[%c0_4, %c0_5] : memref<384x128xbf16, #tpu.memory_space<vmem>>, vector<384x128xbf16>
    %cst = arith.constant dense<0.000000e+00> : vector<256x128xf32>
    %6 = tpu.matmul %4, %5, %cst {dimension_numbers = #tpu.dot_dimension_numbers<[1], [0], [0], [1], [0, 0, 1, 1], [], []>} : vector<256x384xbf16>, vector<384x128xbf16>, vector<256x128xf32> -> vector<256x128xf32>
    %7 = arith.addf %3, %6 : vector<256x128xf32>
    %c0_6 = arith.constant 0 : index
    %c0_7 = arith.constant 0 : index
    %8 = vector.load %arg7[%c0_6, %c0_7] : memref<256x128xf32, #tpu.memory_space<vmem>>, vector<256x128xf32>
    tpu.vector_store %arg7[%c0_6, %c0_7], %7 {strides = array<i32>} : memref<256x128xf32, #tpu.memory_space<vmem>>, vector<256x128xf32>,
    %c0_i32_8 = arith.constant 0 : i32
    %9 = arith.cmpi eq, %arg2, %c0_i32_8 : i32
    %10 = arith.extui %9 : i1 to i32
    %c0_i32_9 = arith.constant 0 : i32
    %11 = arith.cmpi ne, %10, %c0_i32_9 : i32
    scf.if %11 {
      %c0_10 = arith.constant 0 : index
      %c0_11 = arith.constant 0 : index
      %12 = vector.load %arg7[%c0_10, %c0_11] : memref<256x128xf32, #tpu.memory_space<vmem>>, vector<256x128xf32>
      %c0_12 = arith.constant 0 : index
      %c0_13 = arith.constant 0 : index
      %13 = vector.load %arg5[%c0_12, %c0_13] : memref<1x128xf32, #tpu.memory_space<vmem>>, vector<1x128xf32>
      %14 = vector.broadcast %13 : vector<1x128xf32> to vector<256x128xf32>
      %15 = arith.addf %12, %14 : vector<256x128xf32>
      %cst_14 = arith.constant 0.000000e+00 : f32
      %16 = vector.broadcast %cst_14 : f32 to vector<256x128xf32>
      %17 = arith.maximumf %15, %16 : vector<256x128xf32>
      %18 = arith.truncf %17 : vector<256x128xf32> to vector<256x128xbf16>
      %c0_15 = arith.constant 0 : index
      %c0_16 = arith.constant 0 : index
      %19 = vector.load %arg6[%c0_15, %c0_16] : memref<256x128xbf16, #tpu.memory_space<vmem>>, vector<256x128xbf16>
      tpu.vector_store %arg6[%c0_15, %c0_16], %18 {strides = array<i32>} : memref<256x128xbf16, #tpu.memory_space<vmem>>, vector<256x128xbf16>,
    } else {
    }
    return
  }
  func.func @transform_0(%arg0: i32, %arg1: i32, %arg2: i32) -> (i32, i32) {
    %c0_i32 = arith.constant 0 : i32
    return %arg0, %arg2 : i32, i32
  }
  func.func @transform_1(%arg0: i32, %arg1: i32, %arg2: i32) -> (i32, i32) {
    %c0_i32 = arith.constant 0 : i32
    return %arg2, %arg1 : i32, i32
  }
  func.func @transform_2(%arg0: i32, %arg1: i32, %arg2: i32) -> (i32, i32) {
    %c0_i32 = arith.constant 0 : i32
    %c0_i32_0 = arith.constant 0 : i32
    return %c0_i32, %arg1 : i32, i32
  }
  func.func @transform_3(%arg0: i32, %arg1: i32, %arg2: i32) -> (i32, i32) {
    %c0_i32 = arith.constant 0 : i32
    return %arg0, %arg1 : i32, i32
  }
}

</mosaic_0001>

<llo_original>
// kernel: tpu_custom_call.1
$region0: #{tpu_custom_call.1}
  #allocation0 [shape = 'u32[]', space=smem, size = 0x4, offset = 0x4, fixed_abs, tag = 'smem constant byte address 0x4 - core index']
  #allocation1 [shape = 'u32[144,128]{1,0:T(1,128)}', space=vmem, size = 0x12000, scoped, tag = 'internal scratch']
  #allocation2 [shape = 'f32[256,128]{1,0:T(8,128)}', space=vmem, size = 0x20000, scoped, tag = 'scratch operand']
  %s0 = inlined_call_operand.hbm [shape: bf16[512,384], index: 0, kind: input, shape index: {}]
  %s1 = inlined_call_operand.hbm [shape: bf16[384,128], index: 1, kind: input, shape index: {}]
  %s2 = inlined_call_operand.vmem [shape: f32[1,128], index: 2, kind: input, shape index: {}]
  %s3 = inlined_call_operand.hbm [shape: bf16[512,128], index: 3, kind: output, shape index: {}]
  %s4 = sld [smem:[#allocation0]]
  $region61: #{tpu_custom_call.1} parent=0
    _
  %s6 = ssub.s32 1, %s4
  %s7 = scalar_select 0, %s6, %s4
  $region1: #{tpu_custom_call.1} parent=0
    #allocation3 [shape = 'u8[393216]{0}', space=vmem, size = 0x60000, scoped, tag = 'input window, operand 0']
    #allocation4 [shape = 's32[2]{0}', space=sflag, size = 0x8, scoped, tag = 'scoped memory for tpu_custom_call.1']
    #allocation5 [shape = 's32[2]{0}', space=sflag, size = 0x8, scoped, tag = 'scoped memory for tpu_custom_call.1']
    #allocation6 [shape = 'u8[98304]{0}', space=vmem, size = 0x18000, scoped, tag = 'input window, operand 1, single buffered']
    #allocation7 [shape = 's32[1]{0}', space=sflag, size = 0x4, scoped, tag = 'scoped memory for tpu_custom_call.1']
    #allocation8 [shape = 'u8[131072]{0}', space=vmem, size = 0x20000, scoped, tag = 'output window, operand 0']
    %8 = vsyncpa [#allocation4], 0
    %s9 = scalar_lea.sflag [#allocation4], 1
    %10 = vsyncpa %s9, 0
    %11 = vsyncpa [#allocation7], 0
    %12 = vsyncpa [#allocation5], 0
    %s13 = scalar_lea.sflag [#allocation5], 1
    %14 = vsyncpa %s13, 0
    loop: start=0, step=1, limit=4
    $region2: #{tpu_custom_call.1} parent=1 // loop_pre_header
      _
    $region3: #{tpu_custom_call.1} parent=1 // loop_header
      %s16 = sphi 0, %s20
      %p17 = scmp.ge.s32.totalorder %s16, 4
      %s23 = sphi 0, %s42
      %s24 = sphi 0, %s38
      %s25 = sphi 0, %s34
      %s26 = sphi 0, %s23
      %s27 = sphi 0, %s24
      %s28 = sphi 0, %s25
      %s29 = sphi 0, %s26
      %s30 = sphi 0, %s27
      %s31 = sphi 0, %s28
      %s47 = sphi 0, %s49
      %s50 = sphi 0, %s47
      %s51 = sphi 0, %s50
      %s67 = sphi 0, %s51
      %s75 = sphi 0, %s77
      %s78 = sphi 0, %s75
      %s79 = sphi 0, %s78
      %s95 = sphi 0, %s79
      %s101 = sphi 0, %s103
      %s104 = sphi 0, %s101
      %s105 = sphi 0, %s104
      %s121 = sphi 0, %s105
      %s129 = sphi 0, %s131
      %s132 = sphi 0, %s129
      %s133 = sphi 0, %s132
      %s149 = sphi 0, %s133
    $region4: #{tpu_custom_call.1} parent=1 // loop_header_branch
      %19 = sbr.rel (%p17) target = $region8
    $region5: #{tpu_custom_call.1} parent=1 // loop_body
      %s21 = ssub.s32 %s16, 1
      %s22 = ssub.s32 %s16, 2
      %s32 = sadd.s32 1, %s25
      %p33 = scmp.ge.s32.totalorder %s32, 1
      %s34 = scalar_select %p33, 0, %s32
      %s35 = sadd.s32 1, %s24
      %s36 = scalar_select %p33, %s35, %s24
      %p37 = scmp.ge.s32.totalorder %s36, 1
      %s38 = scalar_select %p37, 0, %s36
      %s39 = sadd.s32 1, %s23
      %s40 = scalar_select %p37, %s39, %s23
      %p41 = scmp.ge.s32.totalorder %s40, 2
      %s42 = scalar_select %p41, 0, %s40
      %s43 = ssub.s32 %s23, %s42
      %s44 = ssub.s32 %s25, %s34
      %s45 = sor.u32 %s43, %s44
      %p46 = scmp.eq.s32.totalorder %s45, 0
      %s48 = sadd.s32 %s47, 1
      %s49 = scalar_select %p46, %s47, %s48
      %p52 = pneg %p46
      %p53 = scmp.eq.s32.totalorder %s16, 1
      %p54 = por %p52, %p53
      %p55 = scmp.ne.s32.totalorder %s47, %s50
      %p56 = scmp.eq.s32.totalorder %s16, 0
      %p57 = por %p55, %p56
      %p58 = scmp.ne.s32.totalorder %s47, %s50
      %p59 = scmp.eq.s32.totalorder %s21, 1
      %p60 = por %p58, %p59
      %p61 = scmp.ne.s32.totalorder %s50, %s51
      %p62 = scmp.eq.s32.totalorder %s21, 0
      %p63 = por %p61, %p62
      %p64 = scmp.ne.s32.totalorder %s50, %s51
      %p65 = scmp.eq.s32.totalorder %s22, 1
      %p66 = por %p64, %p65
      %p68 = scmp.ne.s32.totalorder %s51, %s67
      %p69 = scmp.eq.s32.totalorder %s22, 0
      %p70 = por %p68, %p69
      %s71 = ssub.s32 %s25, %s34
      %s72 = ssub.s32 %s24, %s38
      %s73 = sor.u32 %s71, %s72
      %p74 = scmp.eq.s32.totalorder %s73, 0
      %s76 = sadd.s32 %s75, 1
      %s77 = scalar_select %p74, %s75, %s76
      %p80 = pneg %p74
      %p81 = scmp.eq.s32.totalorder %s16, 1
      %p82 = por %p80, %p81
      %p83 = scmp.ne.s32.totalorder %s75, %s78
      %p84 = scmp.eq.s32.totalorder %s16, 0
      %p85 = por %p83, %p84
      %p86 = scmp.ne.s32.totalorder %s75, %s78
      %p87 = scmp.eq.s32.totalorder %s21, 1
      %p88 = por %p86, %p87
      %p89 = scmp.ne.s32.totalorder %s78, %s79
      %p90 = scmp.eq.s32.totalorder %s21, 0
      %p91 = por %p89, %p90
      %p92 = scmp.ne.s32.totalorder %s78, %s79
      %p93 = scmp.eq.s32.totalorder %s22, 1
      %p94 = por %p92, %p93
      %p96 = scmp.ne.s32.totalorder %s79, %s95
      %p97 = scmp.eq.s32.totalorder %s22, 0
      %p98 = por %p96, %p97
      %s99 = ssub.s32 %s24, %s38
      %p100 = scmp.eq.s32.totalorder %s99, 0
      %s102 = sadd.s32 %s101, 1
      %s103 = scalar_select %p100, %s101, %s102
      %p106 = pneg %p100
      %p107 = scmp.eq.s32.totalorder %s16, 1
      %p108 = por %p106, %p107
      %p109 = scmp.ne.s32.totalorder %s101, %s104
      %p110 = scmp.eq.s32.totalorder %s16, 0
      %p111 = por %p109, %p110
      %p112 = scmp.ne.s32.totalorder %s101, %s104
      %p113 = scmp.eq.s32.totalorder %s21, 1
      %p114 = por %p112, %p113
      %p115 = scmp.ne.s32.totalorder %s104, %s105
      %p116 = scmp.eq.s32.totalorder %s21, 0
      %p117 = por %p115, %p116
      %p118 = scmp.ne.s32.totalorder %s104, %s105
      %p119 = scmp.eq.s32.totalorder %s22, 1
      %p120 = por %p118, %p119
      %p122 = scmp.ne.s32.totalorder %s105, %s121
      %p123 = scmp.eq.s32.totalorder %s22, 0
      %p124 = por %p122, %p123
      %s125 = ssub.s32 %s23, %s42
      %s126 = ssub.s32 %s24, %s38
      %s127 = sor.u32 %s125, %s126
      %p128 = scmp.eq.s32.totalorder %s127, 0
      %s130 = sadd.s32 %s129, 1
      %s131 = scalar_select %p128, %s129, %s130
      %p134 = pneg %p128
      %p135 = scmp.eq.s32.totalorder %s16, 1
      %p136 = por %p134, %p135
      %p137 = scmp.ne.s32.totalorder %s129, %s132
      %p138 = scmp.eq.s32.totalorder %s16, 0
      %p139 = por %p137, %p138
      %p140 = scmp.ne.s32.totalorder %s129, %s132
      %p141 = scmp.eq.s32.totalorder %s21, 1
      %p142 = por %p140, %p141
      %p143 = scmp.ne.s32.totalorder %s132, %s133
      %p144 = scmp.eq.s32.totalorder %s21, 0
      %p145 = por %p143, %p144
      %p146 = scmp.ne.s32.totalorder %s132, %s133
      %p147 = scmp.eq.s32.totalorder %s22, 1
      %p148 = por %p146, %p147
      %p150 = scmp.ne.s32.totalorder %s133, %s149
      %p151 = scmp.eq.s32.totalorder %s22, 0
      %p152 = por %p150, %p151
      %p153 = scmp.le.s32.totalorder 1, %s16
      %p154 = scmp.lt.s32.totalorder %s16, 3
      %p155 = pnand %p153, %p154
      %p156 = pneg %p155
      // Predicated region
      $region9: #{tpu_custom_call.1} parent=5 // pred_check
        _
      $region10: #{tpu_custom_call.1} parent=5 // pred_check_branch
        %158 = sbr.rel (%p155) target = $region12
      $region11: #{tpu_custom_call.1} parent=5 // pred_region
        %s159 = ssub.s32 %s16, 1
        // Predicated region
        $region13: #{tpu_custom_call.1} parent=11 // pred_check
          %p160 = pneg %p91
        $region14: #{tpu_custom_call.1} parent=11 // pred_check_branch
          %162 = sbr.rel (%p160) target = $region16
        $region15: #{tpu_custom_call.1} parent=11 // pred_region
          %s163 = smul.u32 48, %s28
          %s165 = ssub.s32 3072, 3072
          %166 = vsyncadd [#allocation7], %s165
          %s167 = sadd.s32 %s27, %s163
          %s168 = smul.addr %s167, 64
          %s169 = scalar_lea.hbm %s1, %s168
          %s170 = sshll.u32 [#allocation6], 4
          %s171 = int_to_ptr.vmem [resolvable:$true] %s170
          %176 = dma.hbm_to_vmem [thread:$0]  %s169, 3072, %s171, [#allocation7], 64, 64, 4
        $region16: #{tpu_custom_call.1} parent=11 // pred_fallthru
          _
        // Predicated region
        $region17: #{tpu_custom_call.1} parent=11 // pred_check
          %p177 = pneg %p117
        $region18: #{tpu_custom_call.1} parent=11 // pred_check_branch
          %179 = sbr.rel (%p177) target = $region20
        $region19: #{tpu_custom_call.1} parent=11 // pred_region
          %p180 = scmp.lt.s32.totalorder %s27, 0
          %s181 = scalar_select %p180, %s27, 0
          %s182 = scalar_lea.vmem %s2, %s181
        $region20: #{tpu_custom_call.1} parent=11 // pred_fallthru
          _
      $region12: #{tpu_custom_call.1} parent=5 // pred_fallthru
        _
      %p183 = scmp.lt.s32.totalorder %s16, 2
      // Predicated region
      $region21: #{tpu_custom_call.1} parent=5 // pred_check
        %p184 = pneg %p183
      $region22: #{tpu_custom_call.1} parent=5 // pred_check_branch
        %186 = sbr.rel (%p184) target = $region24
      $region23: #{tpu_custom_call.1} parent=5 // pred_region
        // Predicated region
        $region25: #{tpu_custom_call.1} parent=23 // pred_check
          %p187 = pneg %p57
        $region26: #{tpu_custom_call.1} parent=23 // pred_check_branch
          %189 = sbr.rel (%p187) target = $region28
        $region27: #{tpu_custom_call.1} parent=23 // pred_region
          %s190 = sand.u32 %s47, 1
          %s191 = scalar_lea.sflag [#allocation4], %s190
          %s192 = sand.u32 %s47, 1
          %s193 = smul.addr %s192, 384
          %s194 = scalar_lea.vmem [#allocation3], %s193
          %s195 = smul.u32 32, %s23
          %s196 = smul.u32 3, %s25
          %s198 = ssub.s32 6144, 6144
          %199 = vsyncadd %s191, %s198
          %s200 = smul.addr %s195, 3
          %s201 = sadd.s32 %s196, %s200
          %s202 = smul.addr %s201, 64
          %s203 = scalar_lea.hbm %s0, %s202
          %s204 = sshll.u32 %s194, 4
          %s205 = int_to_ptr.vmem [resolvable:$true] %s204
          %210 = dma.hbm_to_vmem [thread:$0]  %s203, 6144, %s205, %s191, 192, 192, 12
        $region28: #{tpu_custom_call.1} parent=23 // pred_fallthru
          _
      $region24: #{tpu_custom_call.1} parent=5 // pred_fallthru
        _
      %p211 = scmp.le.s32.totalorder 1, %s16
      %p212 = scmp.lt.s32.totalorder %s16, 3
      %p213 = pnand %p211, %p212
      %p214 = pneg %p213
      // Predicated region
      $region29: #{tpu_custom_call.1} parent=5 // pred_check
        _
      $region30: #{tpu_custom_call.1} parent=5 // pred_check_branch
        %216 = sbr.rel (%p213) target = $region32
      $region31: #{tpu_custom_call.1} parent=5 // pred_region
        %s217 = ssub.s32 %s16, 1
        %s218 = sand.u32 %s50, 1
        %s219 = scalar_lea.sflag [#allocation4], %s218
        %s220 = sand.u32 %s50, 1
        %s221 = smul.addr %s220, 384
        %s222 = scalar_lea.vmem [#allocation3], %s221
        // Predicated region
        $region33: #{tpu_custom_call.1} parent=31 // pred_check
          %p223 = pneg %p63
        $region34: #{tpu_custom_call.1} parent=31 // pred_check_branch
          %225 = sbr.rel (%p223) target = $region36
        $region35: #{tpu_custom_call.1} parent=31 // pred_region
          %226 = dma.done %s219, 6144
        $region36: #{tpu_custom_call.1} parent=31 // pred_fallthru
          _
        // Predicated region
        $region37: #{tpu_custom_call.1} parent=31 // pred_check
          %p227 = pneg %p91
        $region38: #{tpu_custom_call.1} parent=31 // pred_check_branch
          %229 = sbr.rel (%p227) target = $region40
        $region39: #{tpu_custom_call.1} parent=31 // pred_region
          %230 = dma.done [#allocation7], 3072
        $region40: #{tpu_custom_call.1} parent=31 // pred_fallthru
          _
        %s231 = sand.u32 %s50, 1
        %s232 = scalar_lea.sflag [#allocation4], %s231
        %s233 = sand.u32 %s50, 1
        %s234 = smul.addr %s233, 384
        %s235 = scalar_lea.vmem [#allocation3], %s234
        %p236 = pneg %p63
        %p237 = pneg %p60
        %p238 = pneg %p91
        %p239 = pneg %p88
        %p240 = scmp.lt.s32.totalorder %s27, 0
        %s241 = scalar_select %p240, %s27, 0
        %s242 = scalar_lea.vmem %s2, %s241
        %p243 = pneg %p117
        %p244 = pneg %p114
        %p245 = pneg %p145
        %p246 = pneg %p142
        %s247 = sand.u32 %s132, 1
        %s248 = scalar_lea.sflag [#allocation5], %s247
        %s249 = sand.u32 %s132, 1
        %s250 = smul.addr %s249, 128
        %s251 = scalar_lea.vmem [#allocation8], %s250
        %s252 = smul.u32 32, %s26
        %s253 = smul.u32 3, %s28
        %s254 = smul.u32 48, %s28
        %p255 = scmp.lt.s32.totalorder %s27, 0
        %s256 = scalar_select %p255, %s27, 0
        %s257 = scalar_lea.vmem %s2, %s256
        %s258 = smul.u32 32, %s26
        %p260 = scmp.eq.s32.totalorder %s28, 0
        // Predicated region
        $region41: #{tpu_custom_call.1} parent=31 // pred_check
          %p261 = pneg %p260
        $region42: #{tpu_custom_call.1} parent=31 // pred_check_branch
          %263 = sbr.rel (%p261) target = $region44
        $region43: #{tpu_custom_call.1} parent=31 // pred_region
          %264 = vst [vmem:[#allocation2] sm:$0xff] 0.0
          %265 = vst [vmem:[#allocation2 + $0x8] sm:$0xff] 0.0
          %266 = vst [vmem:[#allocation2 + $0x10] sm:$0xff] 0.0
          %267 = vst [vmem:[#allocation2 + $0x18] sm:$0xff] 0.0
          %268 = vst [vmem:[#allocation2 + $0x20] sm:$0xff] 0.0
          %269 = vst [vmem:[#allocation2 + $0x28] sm:$0xff] 0.0
          %270 = vst [vmem:[#allocation2 + $0x30] sm:$0xff] 0.0
          %271 = vst [vmem:[#allocation2 + $0x38] sm:$0xff] 0.0
          %272 = vst [vmem:[#allocation2 + $0x40] sm:$0xff] 0.0
          %273 = vst [vmem:[#allocation2 + $0x48] sm:$0xff] 0.0
          %274 = vst [vmem:[#allocation2 + $0x50] sm:$0xff] 0.0
          %275 = vst [vmem:[#allocation2 + $0x58] sm:$0xff] 0.0
          %276 = vst [vmem:[#allocation2 + $0x60] sm:$0xff] 0.0
          %277 = vst [vmem:[#allocation2 + $0x68] sm:$0xff] 0.0
          %278 = vst [vmem:[#allocation2 + $0x70] sm:$0xff] 0.0
          %279 = vst [vmem:[#allocation2 + $0x78] sm:$0xff] 0.0
          %280 = vst [vmem:[#allocation2 + $0x80] sm:$0xff] 0.0
          %281 = vst [vmem:[#allocation2 + $0x88] sm:$0xff] 0.0
          %282 = vst [vmem:[#allocation2 + $0x90] sm:$0xff] 0.0
          %283 = vst [vmem:[#allocation2 + $0x98] sm:$0xff] 0.0
          %284 = vst [vmem:[#allocation2 + $0xa0] sm:$0xff] 0.0
          %285 = vst [vmem:[#allocation2 + $0xa8] sm:$0xff] 0.0
          %286 = vst [vmem:[#allocation2 + $0xb0] sm:$0xff] 0.0
          %287 = vst [vmem:[#allocation2 + $0xb8] sm:$0xff] 0.0
          %288 = vst [vmem:[#allocation2 + $0xc0] sm:$0xff] 0.0
          %289 = vst [vmem:[#allocation2 + $0xc8] sm:$0xff] 0.0
          %290 = vst [vmem:[#allocation2 + $0xd0] sm:$0xff] 0.0
          %291 = vst [vmem:[#allocation2 + $0xd8] sm:$0xff] 0.0
          %292 = vst [vmem:[#allocation2 + $0xe0] sm:$0xff] 0.0
          %293 = vst [vmem:[#allocation2 + $0xe8] sm:$0xff] 0.0
          %294 = vst [vmem:[#allocation2 + $0xf0] sm:$0xff] 0.0
          %295 = vst [vmem:[#allocation2 + $0xf8] sm:$0xff] 0.0
        $region44: #{tpu_custom_call.1} parent=31 // pred_fallthru
          _
        %v296 = vld [vmem:[#allocation2] sm:$0xff]
        %v297 = vld [vmem:[#allocation2 + $0x8] sm:$0xff]
        %v298 = vld [vmem:[#allocation2 + $0x10] sm:$0xff]
        %v299 = vld [vmem:[#allocation2 + $0x18] sm:$0xff]
        %v300 = vld [vmem:[#allocation2 + $0x20] sm:$0xff]
        %v301 = vld [vmem:[#allocation2 + $0x28] sm:$0xff]
        %v302 = vld [vmem:[#allocation2 + $0x30] sm:$0xff]
        %v303 = vld [vmem:[#allocation2 + $0x38] sm:$0xff]
        %v304 = vld [vmem:[#allocation2 + $0x40] sm:$0xff]
        %v305 = vld [vmem:[#allocation2 + $0x48] sm:$0xff]
        %v306 = vld [vmem:[#allocation2 + $0x50] sm:$0xff]
        %v307 = vld [vmem:[#allocation2 + $0x58] sm:$0xff]
        %v308 = vld [vmem:[#allocation2 + $0x60] sm:$0xff]
        %v309 = vld [vmem:[#allocation2 + $0x68] sm:$0xff]
        %v310 = vld [vmem:[#allocation2 + $0x70] sm:$0xff]
        %v311 = vld [vmem:[#allocation2 + $0x78] sm:$0xff]
        %v312 = vld [vmem:[#allocation2 + $0x80] sm:$0xff]
        %v313 = vld [vmem:[#allocation2 + $0x88] sm:$0xff]
        %v314 = vld [vmem:[#allocation2 + $0x90] sm:$0xff]
        %v315 = vld [vmem:[#allocation2 + $0x98] sm:$0xff]
        %v316 = vld [vmem:[#allocation2 + $0xa0] sm:$0xff]
        %v317 = vld [vmem:[#allocation2 + $0xa8] sm:$0xff]
        %v318 = vld [vmem:[#allocation2 + $0xb0] sm:$0xff]
        %v319 = vld [vmem:[#allocation2 + $0xb8] sm:$0xff]
        %v320 = vld [vmem:[#allocation2 + $0xc0] sm:$0xff]
        %v321 = vld [vmem:[#allocation2 + $0xc8] sm:$0xff]
        %v322 = vld [vmem:[#allocation2 + $0xd0] sm:$0xff]
        %v323 = vld [vmem:[#allocation2 + $0xd8] sm:$0xff]
        %v324 = vld [vmem:[#allocation2 + $0xe0] sm:$0xff]
        %v325 = vld [vmem:[#allocation2 + $0xe8] sm:$0xff]
        %v326 = vld [vmem:[#allocation2 + $0xf0] sm:$0xff]
        %v327 = vld [vmem:[#allocation2 + $0xf8] sm:$0xff]
        %v328 = vld [vmem:[%s222] sm:$0xff]
        %v329 = vld [vmem:[%s222 + $0x8] sm:$0xf]
        %v330 = vld [vmem:[%s222 + $0xc] sm:$0xff]
        %v331 = vld [vmem:[%s222 + $0x14] sm:$0xf]
        %v332 = vld [vmem:[%s222 + $0x18] sm:$0xff]
        %v333 = vld [vmem:[%s222 + $0x20] sm:$0xf]
        %v334 = vld [vmem:[%s222 + $0x24] sm:$0xff]
        %v335 = vld [vmem:[%s222 + $0x2c] sm:$0xf]
        %v336 = vld [vmem:[%s222 + $0x30] sm:$0xff]
        %v337 = vld [vmem:[%s222 + $0x38] sm:$0xf]
        %v338 = vld [vmem:[%s222 + $0x3c] sm:$0xff]
        %v339 = vld [vmem:[%s222 + $0x44] sm:$0xf]
        %v340 = vld [vmem:[%s222 + $0x48] sm:$0xff]
        %v341 = vld [vmem:[%s222 + $0x50] sm:$0xf]
        %v342 = vld [vmem:[%s222 + $0x54] sm:$0xff]
        %v343 = vld [vmem:[%s222 + $0x5c] sm:$0xf]
        %v344 = vld [vmem:[%s222 + $0x60] sm:$0xff]
        %v345 = vld [vmem:[%s222 + $0x68] sm:$0xf]
        %v346 = vld [vmem:[%s222 + $0x6c] sm:$0xff]
        %v347 = vld [vmem:[%s222 + $0x74] sm:$0xf]
        %v348 = vld [vmem:[%s222 + $0x78] sm:$0xff]
        %v349 = vld [vmem:[%s222 + $0x80] sm:$0xf]
        %v350 = vld [vmem:[%s222 + $0x84] sm:$0xff]
        %v351 = vld [vmem:[%s222 + $0x8c] sm:$0xf]
        %v352 = vld [vmem:[%s222 + $0x90] sm:$0xff]
        %v353 = vld [vmem:[%s222 + $0x98] sm:$0xf]
        %v354 = vld [vmem:[%s222 + $0x9c] sm:$0xff]
        %v355 = vld [vmem:[%s222 + $0xa4] sm:$0xf]
        %v356 = vld [vmem:[%s222 + $0xa8] sm:$0xff]
        %v357 = vld [vmem:[%s222 + $0xb0] sm:$0xf]
        %v358 = vld [vmem:[%s222 + $0xb4] sm:$0xff]
        %v359 = vld [vmem:[%s222 + $0xbc] sm:$0xf]
        %v360 = vld [vmem:[%s222 + $0xc0] sm:$0xff]
        %v361 = vld [vmem:[%s222 + $0xc8] sm:$0xf]
        %v362 = vld [vmem:[%s222 + $0xcc] sm:$0xff]
        %v363 = vld [vmem:[%s222 + $0xd4] sm:$0xf]
        %v364 = vld [vmem:[%s222 + $0xd8] sm:$0xff]
        %v365 = vld [vmem:[%s222 + $0xe0] sm:$0xf]
        %v366 = vld [vmem:[%s222 + $0xe4] sm:$0xff]
        %v367 = vld [vmem:[%s222 + $0xec] sm:$0xf]
        %v368 = vld [vmem:[%s222 + $0xf0] sm:$0xff]
        %v369 = vld [vmem:[%s222 + $0xf8] sm:$0xf]
        %v370 = vld [vmem:[%s222 + $0xfc] sm:$0xff]
        %v371 = vld [vmem:[%s222 + $0x104] sm:$0xf]
        %v372 = vld [vmem:[%s222 + $0x108] sm:$0xff]
        %v373 = vld [vmem:[%s222 + $0x110] sm:$0xf]
        %v374 = vld [vmem:[%s222 + $0x114] sm:$0xff]
        %v375 = vld [vmem:[%s222 + $0x11c] sm:$0xf]
        %v376 = vld [vmem:[%s222 + $0x120] sm:$0xff]
        %v377 = vld [vmem:[%s222 + $0x128] sm:$0xf]
        %v378 = vld [vmem:[%s222 + $0x12c] sm:$0xff]
        %v379 = vld [vmem:[%s222 + $0x134] sm:$0xf]
        %v380 = vld [vmem:[%s222 + $0x138] sm:$0xff]
        %v381 = vld [vmem:[%s222 + $0x140] sm:$0xf]
        %v382 = vld [vmem:[%s222 + $0x144] sm:$0xff]
        %v383 = vld [vmem:[%s222 + $0x14c] sm:$0xf]
        %v384 = vld [vmem:[%s222 + $0x150] sm:$0xff]
        %v385 = vld [vmem:[%s222 + $0x158] sm:$0xf]
        %v386 = vld [vmem:[%s222 + $0x15c] sm:$0xff]
        %v387 = vld [vmem:[%s222 + $0x164] sm:$0xf]
        %v388 = vld [vmem:[%s222 + $0x168] sm:$0xff]
        %v389 = vld [vmem:[%s222 + $0x170] sm:$0xf]
        %v390 = vld [vmem:[%s222 + $0x174] sm:$0xff]
        %v391 = vld [vmem:[%s222 + $0x17c] sm:$0xf]
        %v392 = vld [vmem:[#allocation6] sm:$0xf]
        %v393 = vld [vmem:[#allocation6 + $0x4] sm:$0xf]
        %v394 = vld [vmem:[#allocation6 + $0x8] sm:$0xf]
        %v395 = vld [vmem:[#allocation6 + $0xc] sm:$0xf]
        %v396 = vld [vmem:[#allocation6 + $0x10] sm:$0xf]
        %v397 = vld [vmem:[#allocation6 + $0x14] sm:$0xf]
        %v398 = vld [vmem:[#allocation6 + $0x18] sm:$0xf]
        %v399 = vld [vmem:[#allocation6 + $0x1c] sm:$0xf]
        %v400 = vld [vmem:[#allocation6 + $0x20] sm:$0xf]
        %v401 = vld [vmem:[#allocation6 + $0x24] sm:$0xf]
        %v402 = vld [vmem:[#allocation6 + $0x28] sm:$0xf]
        %v403 = vld [vmem:[#allocation6 + $0x2c] sm:$0xf]
        %v404 = vld [vmem:[#allocation6 + $0x30] sm:$0xf]
        %v405 = vld [vmem:[#allocation6 + $0x34] sm:$0xf]
        %v406 = vld [vmem:[#allocation6 + $0x38] sm:$0xf]
        %v407 = vld [vmem:[#allocation6 + $0x3c] sm:$0xf]
        %v408 = vld [vmem:[#allocation6 + $0x40] sm:$0xf]
        %v409 = vld [vmem:[#allocation6 + $0x44] sm:$0xf]
        %v410 = vld [vmem:[#allocation6 + $0x48] sm:$0xf]
        %v411 = vld [vmem:[#allocation6 + $0x4c] sm:$0xf]
        %v412 = vld [vmem:[#allocation6 + $0x50] sm:$0xf]
        %v413 = vld [vmem:[#allocation6 + $0x54] sm:$0xf]
        %v414 = vld [vmem:[#allocation6 + $0x58] sm:$0xf]
        %v415 = vld [vmem:[#allocation6 + $0x5c] sm:$0xf]
        %v416 = vld [vmem:[#allocation6 + $0x60] sm:$0xf]
        %v417 = vld [vmem:[#allocation6 + $0x64] sm:$0xf]
        %v418 = vld [vmem:[#allocation6 + $0x68] sm:$0xf]
        %v419 = vld [vmem:[#allocation6 + $0x6c] sm:$0xf]
        %v420 = vld [vmem:[#allocation6 + $0x70] sm:$0xf]
        %v421 = vld [vmem:[#allocation6 + $0x74] sm:$0xf]
        %v422 = vld [vmem:[#allocation6 + $0x78] sm:$0xf]
        %v423 = vld [vmem:[#allocation6 + $0x7c] sm:$0xf]
        %v424 = vld [vmem:[#allocation6 + $0x80] sm:$0xf]
        %v425 = vld [vmem:[#allocation6 + $0x84] sm:$0xf]
        %v426 = vld [vmem:[#allocation6 + $0x88] sm:$0xf]
        %v427 = vld [vmem:[#allocation6 + $0x8c] sm:$0xf]
        %v428 = vld [vmem:[#allocation6 + $0x90] sm:$0xf]
        %v429 = vld [vmem:[#allocation6 + $0x94] sm:$0xf]
        %v430 = vld [vmem:[#allocation6 + $0x98] sm:$0xf]
        %v431 = vld [vmem:[#allocation6 + $0x9c] sm:$0xf]
        %v432 = vld [vmem:[#allocation6 + $0xa0] sm:$0xf]
        %v433 = vld [vmem:[#allocation6 + $0xa4] sm:$0xf]
        %v434 = vld [vmem:[#allocation6 + $0xa8] sm:$0xf]
        %v435 = vld [vmem:[#allocation6 + $0xac] sm:$0xf]
        %v436 = vld [vmem:[#allocation6 + $0xb0] sm:$0xf]
        %v437 = vld [vmem:[#allocation6 + $0xb4] sm:$0xf]
        %v438 = vld [vmem:[#allocation6 + $0xb8] sm:$0xf]
        %v439 = vld [vmem:[#allocation6 + $0xbc] sm:$0xf]
        %v504 = vunpack.c.l.b16 %v328
        %v505 = vunpack.c.h.b16 %v328
        %v506 = vunpack.c.l.b16 %v329
        %v507 = vunpack.c.l.b16 %v330
        %v508 = vunpack.c.h.b16 %v330
        %v509 = vunpack.c.l.b16 %v331
        %v510 = vunpack.c.l.b16 %v332
        %v511 = vunpack.c.h.b16 %v332
        %v512 = vunpack.c.l.b16 %v333
        %v513 = vunpack.c.l.b16 %v334
        %v514 = vunpack.c.h.b16 %v334
        %v515 = vunpack.c.l.b16 %v335
        %v516 = vunpack.c.l.b16 %v336
        %v517 = vunpack.c.h.b16 %v336
        %v518 = vunpack.c.l.b16 %v337
        %v519 = vunpack.c.l.b16 %v338
        %v520 = vunpack.c.h.b16 %v338
        %v521 = vunpack.c.l.b16 %v339
        %v522 = vunpack.c.l.b16 %v340
        %v523 = vunpack.c.h.b16 %v340
        %v524 = vunpack.c.l.b16 %v341
        %v525 = vunpack.c.l.b16 %v342
        %v526 = vunpack.c.h.b16 %v342
        %v527 = vunpack.c.l.b16 %v343
        %v528 = vunpack.c.l.b16 %v344
        %v529 = vunpack.c.h.b16 %v344
        %v530 = vunpack.c.l.b16 %v345
        %v531 = vunpack.c.l.b16 %v346
        %v532 = vunpack.c.h.b16 %v346
        %v533 = vunpack.c.l.b16 %v347
        %v534 = vunpack.c.l.b16 %v348
        %v535 = vunpack.c.h.b16 %v348
        %v536 = vunpack.c.l.b16 %v349
        %v537 = vunpack.c.l.b16 %v350
        %v538 = vunpack.c.h.b16 %v350
        %v539 = vunpack.c.l.b16 %v351
        %v540 = vunpack.c.l.b16 %v352
        %v541 = vunpack.c.h.b16 %v352
        %v542 = vunpack.c.l.b16 %v353
        %v543 = vunpack.c.l.b16 %v354
        %v544 = vunpack.c.h.b16 %v354
        %v545 = vunpack.c.l.b16 %v355
        %v546 = vunpack.c.l.b16 %v356
        %v547 = vunpack.c.h.b16 %v356
        %v548 = vunpack.c.l.b16 %v357
        %v549 = vunpack.c.l.b16 %v358
        %v550 = vunpack.c.h.b16 %v358
        %v551 = vunpack.c.l.b16 %v359
        %v552 = vunpack.c.l.b16 %v360
        %v553 = vunpack.c.h.b16 %v360
        %v554 = vunpack.c.l.b16 %v361
        %v555 = vunpack.c.l.b16 %v362
        %v556 = vunpack.c.h.b16 %v362
        %v557 = vunpack.c.l.b16 %v363
        %v558 = vunpack.c.l.b16 %v364
        %v559 = vunpack.c.h.b16 %v364
        %v560 = vunpack.c.l.b16 %v365
        %v561 = vunpack.c.l.b16 %v366
        %v562 = vunpack.c.h.b16 %v366
        %v563 = vunpack.c.l.b16 %v367
        %v564 = vunpack.c.l.b16 %v368
        %v565 = vunpack.c.h.b16 %v368
        %v566 = vunpack.c.l.b16 %v369
        %v567 = vunpack.c.l.b16 %v370
        %v568 = vunpack.c.h.b16 %v370
        %v569 = vunpack.c.l.b16 %v371
        %v570 = vunpack.c.l.b16 %v372
        %v571 = vunpack.c.h.b16 %v372
        %v572 = vunpack.c.l.b16 %v373
        %v573 = vunpack.c.l.b16 %v374
        %v574 = vunpack.c.h.b16 %v374
        %v575 = vunpack.c.l.b16 %v375
        %v576 = vunpack.c.l.b16 %v376
        %v577 = vunpack.c.h.b16 %v376
        %v578 = vunpack.c.l.b16 %v377
        %v579 = vunpack.c.l.b16 %v378
        %v580 = vunpack.c.h.b16 %v378
        %v581 = vunpack.c.l.b16 %v379
        %v582 = vunpack.c.l.b16 %v380
        %v583 = vunpack.c.h.b16 %v380
        %v584 = vunpack.c.l.b16 %v381
        %v585 = vunpack.c.l.b16 %v382
        %v586 = vunpack.c.h.b16 %v382
        %v587 = vunpack.c.l.b16 %v383
        %v588 = vunpack.c.l.b16 %v384
        %v589 = vunpack.c.h.b16 %v384
        %v590 = vunpack.c.l.b16 %v385
        %v591 = vunpack.c.l.b16 %v386
        %v592 = vunpack.c.h.b16 %v386
        %v593 = vunpack.c.l.b16 %v387
        %v594 = vunpack.c.l.b16 %v388
        %v595 = vunpack.c.h.b16 %v388
        %v596 = vunpack.c.l.b16 %v389
        %v597 = vunpack.c.l.b16 %v390
        %v598 = vunpack.c.h.b16 %v390
        %v599 = vunpack.c.l.b16 %v391
        %v600 = vpack.c.b16 %v507, %v504
        %v601 = vpack.c.b16 %v508, %v505
        %v602 = vpack.c.b16 %v509, %v506
        %v603 = vpack.c.b16 %v513, %v510
        %v604 = vpack.c.b16 %v514, %v511
        %v605 = vpack.c.b16 %v515, %v512
        %v606 = vpack.c.b16 %v519, %v516
        %v607 = vpack.c.b16 %v520, %v517
        %v608 = vpack.c.b16 %v521, %v518
        %v609 = vpack.c.b16 %v525, %v522
        %v610 = vpack.c.b16 %v526, %v523
        %v611 = vpack.c.b16 %v527, %v524
        %v612 = vpack.c.b16 %v531, %v528
        %v613 = vpack.c.b16 %v532, %v529
        %v614 = vpack.c.b16 %v533, %v530
        %v615 = vpack.c.b16 %v537, %v534
        %v616 = vpack.c.b16 %v538, %v535
        %v617 = vpack.c.b16 %v539, %v536
        %v618 = vpack.c.b16 %v543, %v540
        %v619 = vpack.c.b16 %v544, %v541
        %v620 = vpack.c.b16 %v545, %v542
        %v621 = vpack.c.b16 %v549, %v546
        %v622 = vpack.c.b16 %v550, %v547
        %v623 = vpack.c.b16 %v551, %v548
        %v624 = vpack.c.b16 %v555, %v552
        %v625 = vpack.c.b16 %v556, %v553
        %v626 = vpack.c.b16 %v557, %v554
        %v627 = vpack.c.b16 %v561, %v558
        %v628 = vpack.c.b16 %v562, %v559
        %v629 = vpack.c.b16 %v563, %v560
        %v630 = vpack.c.b16 %v567, %v564
        %v631 = vpack.c.b16 %v568, %v565
        %v632 = vpack.c.b16 %v569, %v566
        %v633 = vpack.c.b16 %v573, %v570
        %v634 = vpack.c.b16 %v574, %v571
        %v635 = vpack.c.b16 %v575, %v572
        %v636 = vpack.c.b16 %v579, %v576
        %v637 = vpack.c.b16 %v580, %v577
        %v638 = vpack.c.b16 %v581, %v578
        %v639 = vpack.c.b16 %v585, %v582
        %v640 = vpack.c.b16 %v586, %v583
        %v641 = vpack.c.b16 %v587, %v584
        %v642 = vpack.c.b16 %v591, %v588
        %v643 = vpack.c.b16 %v592, %v589
        %v644 = vpack.c.b16 %v593, %v590
        %v645 = vpack.c.b16 %v597, %v594
        %v646 = vpack.c.b16 %v598, %v595
        %v647 = vpack.c.b16 %v599, %v596
        %v744 = vunpack.c.l.b16 %v392
        %v745 = vunpack.c.l.b16 %v393
        %v746 = vunpack.c.l.b16 %v394
        %v747 = vunpack.c.l.b16 %v395
        %v748 = vunpack.c.l.b16 %v396
        %v749 = vunpack.c.l.b16 %v397
        %v750 = vunpack.c.l.b16 %v398
        %v751 = vunpack.c.l.b16 %v399
        %v752 = vunpack.c.l.b16 %v400
        %v753 = vunpack.c.l.b16 %v401
        %v754 = vunpack.c.l.b16 %v402
        %v755 = vunpack.c.l.b16 %v403
        %v756 = vunpack.c.l.b16 %v404
        %v757 = vunpack.c.l.b16 %v405
        %v758 = vunpack.c.l.b16 %v406
        %v759 = vunpack.c.l.b16 %v407
        %v760 = vunpack.c.l.b16 %v408
        %v761 = vunpack.c.l.b16 %v409
        %v762 = vunpack.c.l.b16 %v410
        %v763 = vunpack.c.l.b16 %v411
        %v764 = vunpack.c.l.b16 %v412
        %v765 = vunpack.c.l.b16 %v413
        %v766 = vunpack.c.l.b16 %v414
        %v767 = vunpack.c.l.b16 %v415
        %v768 = vunpack.c.l.b16 %v416
        %v769 = vunpack.c.l.b16 %v417
        %v770 = vunpack.c.l.b16 %v418
        %v771 = vunpack.c.l.b16 %v419
        %v772 = vunpack.c.l.b16 %v420
        %v773 = vunpack.c.l.b16 %v421
        %v774 = vunpack.c.l.b16 %v422
        %v775 = vunpack.c.l.b16 %v423
        %v776 = vunpack.c.l.b16 %v424
        %v777 = vunpack.c.l.b16 %v425
        %v778 = vunpack.c.l.b16 %v426
        %v779 = vunpack.c.l.b16 %v427
        %v780 = vunpack.c.l.b16 %v428
        %v781 = vunpack.c.l.b16 %v429
        %v782 = vunpack.c.l.b16 %v430
        %v783 = vunpack.c.l.b16 %v431
        %v784 = vunpack.c.l.b16 %v432
        %v785 = vunpack.c.l.b16 %v433
        %v786 = vunpack.c.l.b16 %v434
        %v787 = vunpack.c.l.b16 %v435
        %v788 = vunpack.c.l.b16 %v436
        %v789 = vunpack.c.l.b16 %v437
        %v790 = vunpack.c.l.b16 %v438
        %v791 = vunpack.c.l.b16 %v439
        %v792 = vpack.c.b16 %v745, %v744
        %v793 = vpack.c.b16 %v747, %v746
        %v794 = vpack.c.b16 %v749, %v748
        %v795 = vpack.c.b16 %v751, %v750
        %v796 = vpack.c.b16 %v753, %v752
        %v797 = vpack.c.b16 %v755, %v754
        %v798 = vpack.c.b16 %v757, %v756
        %v799 = vpack.c.b16 %v759, %v758
        %v800 = vpack.c.b16 %v761, %v760
        %v801 = vpack.c.b16 %v763, %v762
        %v802 = vpack.c.b16 %v765, %v764
        %v803 = vpack.c.b16 %v767, %v766
        %v804 = vpack.c.b16 %v769, %v768
        %v805 = vpack.c.b16 %v771, %v770
        %v806 = vpack.c.b16 %v773, %v772
        %v807 = vpack.c.b16 %v775, %v774
        %v808 = vpack.c.b16 %v777, %v776
        %v809 = vpack.c.b16 %v779, %v778
        %v810 = vpack.c.b16 %v781, %v780
        %v811 = vpack.c.b16 %v783, %v782
        %v812 = vpack.c.b16 %v785, %v784
        %v813 = vpack.c.b16 %v787, %v786
        %v814 = vpack.c.b16 %v789, %v788
        %v815 = vpack.c.b16 %v791, %v790
        %840 = vmatprep.subr.bf16.mxu0 0
        %841 = vmatpush1.bf16.msra.mxu0 %v799
        %842 = vmatprep.subr.bf16.mxu0 0
        %843 = vmatpush1.bf16.msra.mxu0 %v798
        %844 = vmatprep.subr.bf16.mxu0 0
        %845 = vmatpush1.bf16.msra.mxu0 %v797
        %846 = vmatprep.subr.bf16.mxu0 0
        %847 = vmatpush1.bf16.msra.mxu0 %v796
        %848 = vmatprep.subr.bf16.mxu0 0
        %849 = vmatpush1.bf16.msra.mxu0 %v795
        %850 = vmatprep.subr.bf16.mxu0 0
        %851 = vmatpush1.bf16.msra.mxu0 %v794
        %852 = vmatprep.subr.bf16.mxu0 0
        %853 = vmatpush1.bf16.msra.mxu0 %v793
        %854 = vmatprep.subr.bf16.mxu0 0
        %855 = vmatpush1.bf16.msra.mxu0 %v792
        %856 = vmatprep.subr.bf16.mxu0 0
        %857 = vmatpush2.bf16.msra.mxu0 %v807
        %858 = vmatprep.subr.bf16.mxu0 0
        %859 = vmatpush2.bf16.msra.mxu0 %v806
        %860 = vmatprep.subr.bf16.mxu0 0
        %861 = vmatpush2.bf16.msra.mxu0 %v805
        %862 = vmatprep.subr.bf16.mxu0 0
        %863 = vmatpush2.bf16.msra.mxu0 %v804
        %864 = vmatprep.subr.bf16.mxu0 0
        %865 = vmatpush2.bf16.msra.mxu0 %v803
        %866 = vmatprep.subr.bf16.mxu0 0
        %867 = vmatpush2.bf16.msra.mxu0 %v802
        %868 = vmatprep.subr.bf16.mxu0 0
        %869 = vmatpush2.bf16.msra.mxu0 %v801
        %870 = vmatprep.subr.bf16.mxu0 0
        %871 = vmatpush2.bf16.msra.mxu0 %v800
        %872 = vmatprep.mubr.bf16.mxu0 %v601
        %873 = vmatmul.mubr.bf16.gmra.mxu0 %v600
        %v874 = vpop.f32.mrf.mxu0
        %v875 = vadd.f32 0.0, %v874
        %v876 = vpop.f32.mrf.mxu0
        %v877 = vpop.f32.mrf.mxu0
        %v878 = vadd.f32 0.0, %v877
        %v879 = vpop.f32.mrf.mxu0
        %880 = vmatprep.mubr.bf16.mxu0 %v604
        %881 = vmatmul.mubr.bf16.gmra.mxu0 %v603
        %v882 = vpop.f32.mrf.mxu0
        %v883 = vadd.f32 0.0, %v882
        %v884 = vpop.f32.mrf.mxu0
        %v885 = vpop.f32.mrf.mxu0
        %v886 = vadd.f32 0.0, %v885
        %v887 = vpop.f32.mrf.mxu0
        %888 = vmatprep.mubr.bf16.mxu0 %v607
        %889 = vmatmul.mubr.bf16.gmra.mxu0 %v606
        %v890 = vpop.f32.mrf.mxu0
        %v891 = vadd.f32 0.0, %v890
        %v892 = vpop.f32.mrf.mxu0
        %v893 = vpop.f32.mrf.mxu0
        %v894 = vadd.f32 0.0, %v893
        %v895 = vpop.f32.mrf.mxu0
        %896 = vmatprep.mubr.bf16.mxu0 %v610
        %897 = vmatmul.mubr.bf16.gmra.mxu0 %v609
        %v898 = vpop.f32.mrf.mxu0
        %v899 = vadd.f32 0.0, %v898
        %v900 = vpop.f32.mrf.mxu0
        %v901 = vpop.f32.mrf.mxu0
        %v902 = vadd.f32 0.0, %v901
        %v903 = vpop.f32.mrf.mxu0
        %904 = vmatprep.mubr.bf16.mxu0 %v613
        %905 = vmatmul.mubr.bf16.gmra.mxu0 %v612
        %v906 = vpop.f32.mrf.mxu0
        %v907 = vadd.f32 0.0, %v906
        %v908 = vpop.f32.mrf.mxu0
        %v909 = vpop.f32.mrf.mxu0
        %v910 = vadd.f32 0.0, %v909
        %v911 = vpop.f32.mrf.mxu0
        %912 = vmatprep.mubr.bf16.mxu0 %v616
        %913 = vmatmul.mubr.bf16.gmra.mxu0 %v615
        %v914 = vpop.f32.mrf.mxu0
        %v915 = vadd.f32 0.0, %v914
        %v916 = vpop.f32.mrf.mxu0
        %v917 = vpop.f32.mrf.mxu0
        %v918 = vadd.f32 0.0, %v917
        %v919 = vpop.f32.mrf.mxu0
        %920 = vmatprep.mubr.bf16.mxu0 %v619
        %921 = vmatmul.mubr.bf16.gmra.mxu0 %v618
        %v922 = vpop.f32.mrf.mxu0
        %v923 = vadd.f32 0.0, %v922
        %v924 = vpop.f32.mrf.mxu0
        %v925 = vpop.f32.mrf.mxu0
        %v926 = vadd.f32 0.0, %v925
        %v927 = vpop.f32.mrf.mxu0
        %928 = vmatprep.mubr.bf16.mxu0 %v622
        %929 = vmatmul.mubr.bf16.gmra.mxu0 %v621
        %v930 = vpop.f32.mrf.mxu0
        %v931 = vadd.f32 0.0, %v930
        %v932 = vpop.f32.mrf.mxu0
        %v933 = vpop.f32.mrf.mxu0
        %v934 = vadd.f32 0.0, %v933
        %v935 = vpop.f32.mrf.mxu0
        %936 = vmatprep.mubr.bf16.mxu0 %v625
        %937 = vmatmul.mubr.bf16.gmra.mxu0 %v624
        %v938 = vpop.f32.mrf.mxu0
        %v939 = vadd.f32 0.0, %v938
        %v940 = vpop.f32.mrf.mxu0
        %v941 = vpop.f32.mrf.mxu0
        %v942 = vadd.f32 0.0, %v941
        %v943 = vpop.f32.mrf.mxu0
        %944 = vmatprep.mubr.bf16.mxu0 %v628
        %945 = vmatmul.mubr.bf16.gmra.mxu0 %v627
        %v946 = vpop.f32.mrf.mxu0
        %v947 = vadd.f32 0.0, %v946
        %v948 = vpop.f32.mrf.mxu0
        %v949 = vpop.f32.mrf.mxu0
        %v950 = vadd.f32 0.0, %v949
        %v951 = vpop.f32.mrf.mxu0
        %952 = vmatprep.mubr.bf16.mxu0 %v631
        %953 = vmatmul.mubr.bf16.gmra.mxu0 %v630
        %v954 = vpop.f32.mrf.mxu0
        %v955 = vadd.f32 0.0, %v954
        %v956 = vpop.f32.mrf.mxu0
        %v957 = vpop.f32.mrf.mxu0
        %v958 = vadd.f32 0.0, %v957
        %v959 = vpop.f32.mrf.mxu0
        %960 = vmatprep.mubr.bf16.mxu0 %v634
        %961 = vmatmul.mubr.bf16.gmra.mxu0 %v633
        %v962 = vpop.f32.mrf.mxu0
        %v963 = vadd.f32 0.0, %v962
        %v964 = vpop.f32.mrf.mxu0
        %v965 = vpop.f32.mrf.mxu0
        %v966 = vadd.f32 0.0, %v965
        %v967 = vpop.f32.mrf.mxu0
        %968 = vmatprep.mubr.bf16.mxu0 %v637
        %969 = vmatmul.mubr.bf16.gmra.mxu0 %v636
        %v970 = vpop.f32.mrf.mxu0
        %v971 = vadd.f32 0.0, %v970
        %v972 = vpop.f32.mrf.mxu0
        %v973 = vpop.f32.mrf.mxu0
        %v974 = vadd.f32 0.0, %v973
        %v975 = vpop.f32.mrf.mxu0
        %976 = vmatprep.mubr.bf16.mxu0 %v640
        %977 = vmatmul.mubr.bf16.gmra.mxu0 %v639
        %v978 = vpop.f32.mrf.mxu0
        %v979 = vadd.f32 0.0, %v978
        %v980 = vpop.f32.mrf.mxu0
        %v981 = vpop.f32.mrf.mxu0
        %v982 = vadd.f32 0.0, %v981
        %v983 = vpop.f32.mrf.mxu0
        %984 = vmatprep.mubr.bf16.mxu0 %v643
        %985 = vmatmul.mubr.bf16.gmra.mxu0 %v642
        %v986 = vpop.f32.mrf.mxu0
        %v987 = vadd.f32 0.0, %v986
        %v988 = vpop.f32.mrf.mxu0
        %v989 = vpop.f32.mrf.mxu0
        %v990 = vadd.f32 0.0, %v989
        %v991 = vpop.f32.mrf.mxu0
        %992 = vmatprep.mubr.bf16.mxu0 %v646
        %993 = vmatmul.mubr.bf16.gmra.mxu0 %v645
        %v994 = vpop.f32.mrf.mxu0
        %v995 = vadd.f32 0.0, %v994
        %v996 = vpop.f32.mrf.mxu0
        %v997 = vpop.f32.mrf.mxu0
        %v998 = vadd.f32 0.0, %v997
        %v999 = vpop.f32.mrf.mxu0
        %1000 = vdwg.mxu0
        %1001 = vmatprep.subr.bf16.mxu0 0
        %1002 = vmatpush1.bf16.msra.mxu0 %v815
        %1003 = vmatprep.subr.bf16.mxu0 0
        %1004 = vmatpush1.bf16.msra.mxu0 %v814
        %1005 = vmatprep.subr.bf16.mxu0 0
        %1006 = vmatpush1.bf16.msra.mxu0 %v813
        %1007 = vmatprep.subr.bf16.mxu0 0
        %1008 = vmatpush1.bf16.msra.mxu0 %v812
        %1009 = vmatprep.subr.bf16.mxu0 0
        %1010 = vmatpush1.bf16.msra.mxu0 %v811
        %1011 = vmatprep.subr.bf16.mxu0 0
        %1012 = vmatpush1.bf16.msra.mxu0 %v810
        %1013 = vmatprep.subr.bf16.mxu0 0
        %1014 = vmatpush1.bf16.msra.mxu0 %v809
        %1015 = vmatprep.subr.bf16.mxu0 0
        %1016 = vmatpush1.bf16.msra.mxu0 %v808
        %1017 = vmatprep.subr.bf16.mxu0 0
        %1018 = vmatpush2.bf16.msra.mxu0 0
        %1019 = vmatprep.subr.bf16.mxu0 0
        %1020 = vmatpush2.bf16.msra.mxu0 0
        %1021 = vmatprep.subr.bf16.mxu0 0
        %1022 = vmatpush2.bf16.msra.mxu0 0
        %1023 = vmatprep.subr.bf16.mxu0 0
        %1024 = vmatpush2.bf16.msra.mxu0 0
        %1025 = vmatprep.subr.bf16.mxu0 0
        %1026 = vmatpush2.bf16.msra.mxu0 0
        %1027 = vmatprep.subr.bf16.mxu0 0
        %1028 = vmatpush2.bf16.msra.mxu0 0
        %1029 = vmatprep.subr.bf16.mxu0 0
        %1030 = vmatpush2.bf16.msra.mxu0 0
        %1031 = vmatprep.subr.bf16.mxu0 0
        %1032 = vmatpush2.bf16.msra.mxu0 0
        %1033 = vmatprep.mubr.bf16.mxu0 0
        %1034 = vmatmul.mubr.bf16.gmra.mxu0 %v602
        %v1035 = vpop.f32.mrf.mxu0
        %v1036 = vadd.f32 %v875, %v1035
        %v1037 = vpop.f32.mrf.mxu0
        %v1038 = vpop.f32.mrf.mxu0
        %v1039 = vadd.f32 %v878, %v1038
        %v1040 = vpop.f32.mrf.mxu0
        %1041 = vmatprep.mubr.bf16.mxu0 0
        %1042 = vmatmul.mubr.bf16.gmra.mxu0 %v605
        %v1043 = vpop.f32.mrf.mxu0
        %v1044 = vadd.f32 %v883, %v1043
        %v1045 = vpop.f32.mrf.mxu0
        %v1046 = vpop.f32.mrf.mxu0
        %v1047 = vadd.f32 %v886, %v1046
        %v1048 = vpop.f32.mrf.mxu0
        %1049 = vmatprep.mubr.bf16.mxu0 0
        %1050 = vmatmul.mubr.bf16.gmra.mxu0 %v608
        %v1051 = vpop.f32.mrf.mxu0
        %v1052 = vadd.f32 %v891, %v1051
        %v1053 = vpop.f32.mrf.mxu0
        %v1054 = vpop.f32.mrf.mxu0
        %v1055 = vadd.f32 %v894, %v1054
        %v1056 = vpop.f32.mrf.mxu0
        %1057 = vmatprep.mubr.bf16.mxu0 0
        %1058 = vmatmul.mubr.bf16.gmra.mxu0 %v611
        %v1059 = vpop.f32.mrf.mxu0
        %v1060 = vadd.f32 %v899, %v1059
        %v1061 = vpop.f32.mrf.mxu0
        %v1062 = vpop.f32.mrf.mxu0
        %v1063 = vadd.f32 %v902, %v1062
        %v1064 = vpop.f32.mrf.mxu0
        %1065 = vmatprep.mubr.bf16.mxu0 0
        %1066 = vmatmul.mubr.bf16.gmra.mxu0 %v614
        %v1067 = vpop.f32.mrf.mxu0
        %v1068 = vadd.f32 %v907, %v1067
        %v1069 = vpop.f32.mrf.mxu0
        %v1070 = vpop.f32.mrf.mxu0
        %v1071 = vadd.f32 %v910, %v1070
        %v1072 = vpop.f32.mrf.mxu0
        %1073 = vmatprep.mubr.bf16.mxu0 0
        %1074 = vmatmul.mubr.bf16.gmra.mxu0 %v617
        %v1075 = vpop.f32.mrf.mxu0
        %v1076 = vadd.f32 %v915, %v1075
        %v1077 = vpop.f32.mrf.mxu0
        %v1078 = vpop.f32.mrf.mxu0
        %v1079 = vadd.f32 %v918, %v1078
        %v1080 = vpop.f32.mrf.mxu0
        %1081 = vmatprep.mubr.bf16.mxu0 0
        %1082 = vmatmul.mubr.bf16.gmra.mxu0 %v620
        %v1083 = vpop.f32.mrf.mxu0
        %v1084 = vadd.f32 %v923, %v1083
        %v1085 = vpop.f32.mrf.mxu0
        %v1086 = vpop.f32.mrf.mxu0
        %v1087 = vadd.f32 %v926, %v1086
        %v1088 = vpop.f32.mrf.mxu0
        %1089 = vmatprep.mubr.bf16.mxu0 0
        %1090 = vmatmul.mubr.bf16.gmra.mxu0 %v623
        %v1091 = vpop.f32.mrf.mxu0
        %v1092 = vadd.f32 %v931, %v1091
        %v1093 = vpop.f32.mrf.mxu0
        %v1094 = vpop.f32.mrf.mxu0
        %v1095 = vadd.f32 %v934, %v1094
        %v1096 = vpop.f32.mrf.mxu0
        %1097 = vmatprep.mubr.bf16.mxu0 0
        %1098 = vmatmul.mubr.bf16.gmra.mxu0 %v626
        %v1099 = vpop.f32.mrf.mxu0
        %v1100 = vadd.f32 %v939, %v1099
        %v1101 = vpop.f32.mrf.mxu0
        %v1102 = vpop.f32.mrf.mxu0
        %v1103 = vadd.f32 %v942, %v1102
        %v1104 = vpop.f32.mrf.mxu0
        %1105 = vmatprep.mubr.bf16.mxu0 0
        %1106 = vmatmul.mubr.bf16.gmra.mxu0 %v629
        %v1107 = vpop.f32.mrf.mxu0
        %v1108 = vadd.f32 %v947, %v1107
        %v1109 = vpop.f32.mrf.mxu0
        %v1110 = vpop.f32.mrf.mxu0
        %v1111 = vadd.f32 %v950, %v1110
        %v1112 = vpop.f32.mrf.mxu0
        %1113 = vmatprep.mubr.bf16.mxu0 0
        %1114 = vmatmul.mubr.bf16.gmra.mxu0 %v632
        %v1115 = vpop.f32.mrf.mxu0
        %v1116 = vadd.f32 %v955, %v1115
        %v1117 = vpop.f32.mrf.mxu0
        %v1118 = vpop.f32.mrf.mxu0
        %v1119 = vadd.f32 %v958, %v1118
        %v1120 = vpop.f32.mrf.mxu0
        %1121 = vmatprep.mubr.bf16.mxu0 0
        %1122 = vmatmul.mubr.bf16.gmra.mxu0 %v635
        %v1123 = vpop.f32.mrf.mxu0
        %v1124 = vadd.f32 %v963, %v1123
        %v1125 = vpop.f32.mrf.mxu0
        %v1126 = vpop.f32.mrf.mxu0
        %v1127 = vadd.f32 %v966, %v1126
        %v1128 = vpop.f32.mrf.mxu0
        %1129 = vmatprep.mubr.bf16.mxu0 0
        %1130 = vmatmul.mubr.bf16.gmra.mxu0 %v638
        %v1131 = vpop.f32.mrf.mxu0
        %v1132 = vadd.f32 %v971, %v1131
        %v1133 = vpop.f32.mrf.mxu0
        %v1134 = vpop.f32.mrf.mxu0
        %v1135 = vadd.f32 %v974, %v1134
        %v1136 = vpop.f32.mrf.mxu0
        %1137 = vmatprep.mubr.bf16.mxu0 0
        %1138 = vmatmul.mubr.bf16.gmra.mxu0 %v641
        %v1139 = vpop.f32.mrf.mxu0
        %v1140 = vadd.f32 %v979, %v1139
        %v1141 = vpop.f32.mrf.mxu0
        %v1142 = vpop.f32.mrf.mxu0
        %v1143 = vadd.f32 %v982, %v1142
        %v1144 = vpop.f32.mrf.mxu0
        %1145 = vmatprep.mubr.bf16.mxu0 0
        %1146 = vmatmul.mubr.bf16.gmra.mxu0 %v644
        %v1147 = vpop.f32.mrf.mxu0
        %v1148 = vadd.f32 %v987, %v1147
        %v1149 = vpop.f32.mrf.mxu0
        %v1150 = vpop.f32.mrf.mxu0
        %v1151 = vadd.f32 %v990, %v1150
        %v1152 = vpop.f32.mrf.mxu0
        %1153 = vmatprep.mubr.bf16.mxu0 0
        %1154 = vmatmul.mubr.bf16.gmra.mxu0 %v647
        %v1155 = vpop.f32.mrf.mxu0
        %v1156 = vadd.f32 %v995, %v1155
        %v1157 = vpop.f32.mrf.mxu0
        %v1158 = vpop.f32.mrf.mxu0
        %v1159 = vadd.f32 %v998, %v1158
        %v1160 = vpop.f32.mrf.mxu0
        %1161 = vdwg.mxu0
        %v1162 = vadd.f32 %v296, %v1036
        %v1163 = vadd.f32 %v297, %v1039
        %v1164 = vadd.f32 %v298, %v1044
        %v1165 = vadd.f32 %v299, %v1047
        %v1166 = vadd.f32 %v300, %v1052
        %v1167 = vadd.f32 %v301, %v1055
        %v1168 = vadd.f32 %v302, %v1060
        %v1169 = vadd.f32 %v303, %v1063
        %v1170 = vadd.f32 %v304, %v1068
        %v1171 = vadd.f32 %v305, %v1071
        %v1172 = vadd.f32 %v306, %v1076
        %v1173 = vadd.f32 %v307, %v1079
        %v1174 = vadd.f32 %v308, %v1084
        %v1175 = vadd.f32 %v309, %v1087
        %v1176 = vadd.f32 %v310, %v1092
        %v1177 = vadd.f32 %v311, %v1095
        %v1178 = vadd.f32 %v312, %v1100
        %v1179 = vadd.f32 %v313, %v1103
        %v1180 = vadd.f32 %v314, %v1108
        %v1181 = vadd.f32 %v315, %v1111
        %v1182 = vadd.f32 %v316, %v1116
        %v1183 = vadd.f32 %v317, %v1119
        %v1184 = vadd.f32 %v318, %v1124
        %v1185 = vadd.f32 %v319, %v1127
        %v1186 = vadd.f32 %v320, %v1132
        %v1187 = vadd.f32 %v321, %v1135
        %v1188 = vadd.f32 %v322, %v1140
        %v1189 = vadd.f32 %v323, %v1143
        %v1190 = vadd.f32 %v324, %v1148
        %v1191 = vadd.f32 %v325, %v1151
        %v1192 = vadd.f32 %v326, %v1156
        %v1193 = vadd.f32 %v327, %v1159
        %1194 = vst [vmem:[#allocation2] sm:$0xff] %v1162
        %1195 = vst [vmem:[#allocation2 + $0x8] sm:$0xff] %v1163
        %1196 = vst [vmem:[#allocation2 + $0x10] sm:$0xff] %v1164
        %1197 = vst [vmem:[#allocation2 + $0x18] sm:$0xff] %v1165
        %1198 = vst [vmem:[#allocation2 + $0x20] sm:$0xff] %v1166
        %1199 = vst [vmem:[#allocation2 + $0x28] sm:$0xff] %v1167
        %1200 = vst [vmem:[#allocation2 + $0x30] sm:$0xff] %v1168
        %1201 = vst [vmem:[#allocation2 + $0x38] sm:$0xff] %v1169
        %1202 = vst [vmem:[#allocation2 + $0x40] sm:$0xff] %v1170
        %1203 = vst [vmem:[#allocation2 + $0x48] sm:$0xff] %v1171
        %1204 = vst [vmem:[#allocation2 + $0x50] sm:$0xff] %v1172
        %1205 = vst [vmem:[#allocation2 + $0x58] sm:$0xff] %v1173
        %1206 = vst [vmem:[#allocation2 + $0x60] sm:$0xff] %v1174
        %1207 = vst [vmem:[#allocation2 + $0x68] sm:$0xff] %v1175
        %1208 = vst [vmem:[#allocation2 + $0x70] sm:$0xff] %v1176
        %1209 = vst [vmem:[#allocation2 + $0x78] sm:$0xff] %v1177
        %1210 = vst [vmem:[#allocation2 + $0x80] sm:$0xff] %v1178
        %1211 = vst [vmem:[#allocation2 + $0x88] sm:$0xff] %v1179
        %1212 = vst [vmem:[#allocation2 + $0x90] sm:$0xff] %v1180
        %1213 = vst [vmem:[#allocation2 + $0x98] sm:$0xff] %v1181
        %1214 = vst [vmem:[#allocation2 + $0xa0] sm:$0xff] %v1182
        %1215 = vst [vmem:[#allocation2 + $0xa8] sm:$0xff] %v1183
        %1216 = vst [vmem:[#allocation2 + $0xb0] sm:$0xff] %v1184
        %1217 = vst [vmem:[#allocation2 + $0xb8] sm:$0xff] %v1185
        %1218 = vst [vmem:[#allocation2 + $0xc0] sm:$0xff] %v1186
        %1219 = vst [vmem:[#allocation2 + $0xc8] sm:$0xff] %v1187
        %1220 = vst [vmem:[#allocation2 + $0xd0] sm:$0xff] %v1188
        %1221 = vst [vmem:[#allocation2 + $0xd8] sm:$0xff] %v1189
        %1222 = vst [vmem:[#allocation2 + $0xe0] sm:$0xff] %v1190
        %1223 = vst [vmem:[#allocation2 + $0xe8] sm:$0xff] %v1191
        %1224 = vst [vmem:[#allocation2 + $0xf0] sm:$0xff] %v1192
        %1225 = vst [vmem:[#allocation2 + $0xf8] sm:$0xff] %v1193
        // Predicated region
        $region45: #{tpu_custom_call.1} parent=31 // pred_check
          %p1226 = pneg %p260
        $region46: #{tpu_custom_call.1} parent=31 // pred_check_branch
          %1228 = sbr.rel (%p1226) target = $region48
        $region47: #{tpu_custom_call.1} parent=31 // pred_region
          %v1229 = vld [vmem:[#allocation2] sm:$0xff]
          %v1230 = vld [vmem:[#allocation2 + $0x8] sm:$0xff]
          %v1231 = vld [vmem:[#allocation2 + $0x10] sm:$0xff]
          %v1232 = vld [vmem:[#allocation2 + $0x18] sm:$0xff]
          %v1233 = vld [vmem:[#allocation2 + $0x20] sm:$0xff]
          %v1234 = vld [vmem:[#allocation2 + $0x28] sm:$0xff]
          %v1235 = vld [vmem:[#allocation2 + $0x30] sm:$0xff]
          %v1236 = vld [vmem:[#allocation2 + $0x38] sm:$0xff]
          %v1237 = vld [vmem:[#allocation2 + $0x40] sm:$0xff]
          %v1238 = vld [vmem:[#allocation2 + $0x48] sm:$0xff]
          %v1239 = vld [vmem:[#allocation2 + $0x50] sm:$0xff]
          %v1240 = vld [vmem:[#allocation2 + $0x58] sm:$0xff]
          %v1241 = vld [vmem:[#allocation2 + $0x60] sm:$0xff]
          %v1242 = vld [vmem:[#allocation2 + $0x68] sm:$0xff]
          %v1243 = vld [vmem:[#allocation2 + $0x70] sm:$0xff]
          %v1244 = vld [vmem:[#allocation2 + $0x78] sm:$0xff]
          %v1245 = vld [vmem:[#allocation2 + $0x80] sm:$0xff]
          %v1246 = vld [vmem:[#allocation2 + $0x88] sm:$0xff]
          %v1247 = vld [vmem:[#allocation2 + $0x90] sm:$0xff]
          %v1248 = vld [vmem:[#allocation2 + $0x98] sm:$0xff]
          %v1249 = vld [vmem:[#allocation2 + $0xa0] sm:$0xff]
          %v1250 = vld [vmem:[#allocation2 + $0xa8] sm:$0xff]
          %v1251 = vld [vmem:[#allocation2 + $0xb0] sm:$0xff]
          %v1252 = vld [vmem:[#allocation2 + $0xb8] sm:$0xff]
          %v1253 = vld [vmem:[#allocation2 + $0xc0] sm:$0xff]
          %v1254 = vld [vmem:[#allocation2 + $0xc8] sm:$0xff]
          %v1255 = vld [vmem:[#allocation2 + $0xd0] sm:$0xff]
          %v1256 = vld [vmem:[#allocation2 + $0xd8] sm:$0xff]
          %v1257 = vld [vmem:[#allocation2 + $0xe0] sm:$0xff]
          %v1258 = vld [vmem:[#allocation2 + $0xe8] sm:$0xff]
          %v1259 = vld [vmem:[#allocation2 + $0xf0] sm:$0xff]
          %v1260 = vld [vmem:[#allocation2 + $0xf8] sm:$0xff]
          %v1261 = vld [vmem:[%s257] sm:$0x1]
          %v1263 = vlaneseq
          %v1264 = vshrl.u32 %v1263, 7
          %v1265 = vsub.s32 0, %v1264
          %v1266 = vrot.slane %v1261, %v1265
          %v1268 = vadd.f32 %v1229, %v1266
          %v1269 = vadd.f32 %v1230, %v1266
          %v1270 = vadd.f32 %v1231, %v1266
          %v1271 = vadd.f32 %v1232, %v1266
          %v1272 = vadd.f32 %v1233, %v1266
          %v1273 = vadd.f32 %v1234, %v1266
          %v1274 = vadd.f32 %v1235, %v1266
          %v1275 = vadd.f32 %v1236, %v1266
          %v1276 = vadd.f32 %v1237, %v1266
          %v1277 = vadd.f32 %v1238, %v1266
          %v1278 = vadd.f32 %v1239, %v1266
          %v1279 = vadd.f32 %v1240, %v1266
          %v1280 = vadd.f32 %v1241, %v1266
          %v1281 = vadd.f32 %v1242, %v1266
          %v1282 = vadd.f32 %v1243, %v1266
          %v1283 = vadd.f32 %v1244, %v1266
          %v1284 = vadd.f32 %v1245, %v1266
          %v1285 = vadd.f32 %v1246, %v1266
          %v1286 = vadd.f32 %v1247, %v1266
          %v1287 = vadd.f32 %v1248, %v1266
          %v1288 = vadd.f32 %v1249, %v1266
          %v1289 = vadd.f32 %v1250, %v1266
          %v1290 = vadd.f32 %v1251, %v1266
          %v1291 = vadd.f32 %v1252, %v1266
          %v1292 = vadd.f32 %v1253, %v1266
          %v1293 = vadd.f32 %v1254, %v1266
          %v1294 = vadd.f32 %v1255, %v1266
          %v1295 = vadd.f32 %v1256, %v1266
          %v1296 = vadd.f32 %v1257, %v1266
          %v1297 = vadd.f32 %v1258, %v1266
          %v1298 = vadd.f32 %v1259, %v1266
          %v1299 = vadd.f32 %v1260, %v1266
          %v1300 = vmax.f32 %v1268, 0.0
          %v1301 = vmax.f32 %v1269, 0.0
          %v1302 = vmax.f32 %v1270, 0.0
          %v1303 = vmax.f32 %v1271, 0.0
          %v1304 = vmax.f32 %v1272, 0.0
          %v1305 = vmax.f32 %v1273, 0.0
          %v1306 = vmax.f32 %v1274, 0.0
          %v1307 = vmax.f32 %v1275, 0.0
          %v1308 = vmax.f32 %v1276, 0.0
          %v1309 = vmax.f32 %v1277, 0.0
          %v1310 = vmax.f32 %v1278, 0.0
          %v1311 = vmax.f32 %v1279, 0.0
          %v1312 = vmax.f32 %v1280, 0.0
          %v1313 = vmax.f32 %v1281, 0.0
          %v1314 = vmax.f32 %v1282, 0.0
          %v1315 = vmax.f32 %v1283, 0.0
          %v1316 = vmax.f32 %v1284, 0.0
          %v1317 = vmax.f32 %v1285, 0.0
          %v1318 = vmax.f32 %v1286, 0.0
          %v1319 = vmax.f32 %v1287, 0.0
          %v1320 = vmax.f32 %v1288, 0.0
          %v1321 = vmax.f32 %v1289, 0.0
          %v1322 = vmax.f32 %v1290, 0.0
          %v1323 = vmax.f32 %v1291, 0.0
          %v1324 = vmax.f32 %v1292, 0.0
          %v1325 = vmax.f32 %v1293, 0.0
          %v1326 = vmax.f32 %v1294, 0.0
          %v1327 = vmax.f32 %v1295, 0.0
          %v1328 = vmax.f32 %v1296, 0.0
          %v1329 = vmax.f32 %v1297, 0.0
          %v1330 = vmax.f32 %v1298, 0.0
          %v1331 = vmax.f32 %v1299, 0.0
          %v1332 = vpack.c.bf16 %v1301, %v1300
          %v1333 = vpack.c.bf16 %v1303, %v1302
          %v1334 = vpack.c.bf16 %v1305, %v1304
          %v1335 = vpack.c.bf16 %v1307, %v1306
          %v1336 = vpack.c.bf16 %v1309, %v1308
          %v1337 = vpack.c.bf16 %v1311, %v1310
          %v1338 = vpack.c.bf16 %v1313, %v1312
          %v1339 = vpack.c.bf16 %v1315, %v1314
          %v1340 = vpack.c.bf16 %v1317, %v1316
          %v1341 = vpack.c.bf16 %v1319, %v1318
          %v1342 = vpack.c.bf16 %v1321, %v1320
          %v1343 = vpack.c.bf16 %v1323, %v1322
          %v1344 = vpack.c.bf16 %v1325, %v1324
          %v1345 = vpack.c.bf16 %v1327, %v1326
          %v1346 = vpack.c.bf16 %v1329, %v1328
          %v1347 = vpack.c.bf16 %v1331, %v1330
          %v1364 = vunpack.c.l.b16 %v1332
          %v1365 = vunpack.c.h.b16 %v1332
          %v1366 = vunpack.c.l.b16 %v1333
          %v1367 = vunpack.c.h.b16 %v1333
          %v1368 = vunpack.c.l.b16 %v1334
          %v1369 = vunpack.c.h.b16 %v1334
          %v1370 = vunpack.c.l.b16 %v1335
          %v1371 = vunpack.c.h.b16 %v1335
          %v1372 = vunpack.c.l.b16 %v1336
          %v1373 = vunpack.c.h.b16 %v1336
          %v1374 = vunpack.c.l.b16 %v1337
          %v1375 = vunpack.c.h.b16 %v1337
          %v1376 = vunpack.c.l.b16 %v1338
          %v1377 = vunpack.c.h.b16 %v1338
          %v1378 = vunpack.c.l.b16 %v1339
          %v1379 = vunpack.c.h.b16 %v1339
          %v1380 = vunpack.c.l.b16 %v1340
          %v1381 = vunpack.c.h.b16 %v1340
          %v1382 = vunpack.c.l.b16 %v1341
          %v1383 = vunpack.c.h.b16 %v1341
          %v1384 = vunpack.c.l.b16 %v1342
          %v1385 = vunpack.c.h.b16 %v1342
          %v1386 = vunpack.c.l.b16 %v1343
          %v1387 = vunpack.c.h.b16 %v1343
          %v1388 = vunpack.c.l.b16 %v1344
          %v1389 = vunpack.c.h.b16 %v1344
          %v1390 = vunpack.c.l.b16 %v1345
          %v1391 = vunpack.c.h.b16 %v1345
          %v1392 = vunpack.c.l.b16 %v1346
          %v1393 = vunpack.c.h.b16 %v1346
          %v1394 = vunpack.c.l.b16 %v1347
          %v1395 = vunpack.c.h.b16 %v1347
          %v1396 = vpack.c.b16 %v1364, %v1364
          %v1397 = vpack.c.b16 %v1365, %v1365
          %v1398 = vpack.c.b16 %v1366, %v1366
          %v1399 = vpack.c.b16 %v1367, %v1367
          %v1400 = vpack.c.b16 %v1368, %v1368
          %v1401 = vpack.c.b16 %v1369, %v1369
          %v1402 = vpack.c.b16 %v1370, %v1370
          %v1403 = vpack.c.b16 %v1371, %v1371
          %v1404 = vpack.c.b16 %v1372, %v1372
          %v1405 = vpack.c.b16 %v1373, %v1373
          %v1406 = vpack.c.b16 %v1374, %v1374
          %v1407 = vpack.c.b16 %v1375, %v1375
          %v1408 = vpack.c.b16 %v1376, %v1376
          %v1409 = vpack.c.b16 %v1377, %v1377
          %v1410 = vpack.c.b16 %v1378, %v1378
          %v1411 = vpack.c.b16 %v1379, %v1379
          %v1412 = vpack.c.b16 %v1380, %v1380
          %v1413 = vpack.c.b16 %v1381, %v1381
          %v1414 = vpack.c.b16 %v1382, %v1382
          %v1415 = vpack.c.b16 %v1383, %v1383
          %v1416 = vpack.c.b16 %v1384, %v1384
          %v1417 = vpack.c.b16 %v1385, %v1385
          %v1418 = vpack.c.b16 %v1386, %v1386
          %v1419 = vpack.c.b16 %v1387, %v1387
          %v1420 = vpack.c.b16 %v1388, %v1388
          %v1421 = vpack.c.b16 %v1389, %v1389
          %v1422 = vpack.c.b16 %v1390, %v1390
          %v1423 = vpack.c.b16 %v1391, %v1391
          %v1424 = vpack.c.b16 %v1392, %v1392
          %v1425 = vpack.c.b16 %v1393, %v1393
          %v1426 = vpack.c.b16 %v1394, %v1394
          %v1427 = vpack.c.b16 %v1395, %v1395
          %1460 = vst [vmem:[%s251] sm:$0xf] %v1396
          %1461 = vst [vmem:[%s251 + $0x4] sm:$0xf] %v1397
          %1462 = vst [vmem:[%s251 + $0x8] sm:$0xf] %v1398
          %1463 = vst [vmem:[%s251 + $0xc] sm:$0xf] %v1399
          %1464 = vst [vmem:[%s251 + $0x10] sm:$0xf] %v1400
          %1465 = vst [vmem:[%s251 + $0x14] sm:$0xf] %v1401
          %1466 = vst [vmem:[%s251 + $0x18] sm:$0xf] %v1402
          %1467 = vst [vmem:[%s251 + $0x1c] sm:$0xf] %v1403
          %1468 = vst [vmem:[%s251 + $0x20] sm:$0xf] %v1404
          %1469 = vst [vmem:[%s251 + $0x24] sm:$0xf] %v1405
          %1470 = vst [vmem:[%s251 + $0x28] sm:$0xf] %v1406
          %1471 = vst [vmem:[%s251 + $0x2c] sm:$0xf] %v1407
          %1472 = vst [vmem:[%s251 + $0x30] sm:$0xf] %v1408
          %1473 = vst [vmem:[%s251 + $0x34] sm:$0xf] %v1409
          %1474 = vst [vmem:[%s251 + $0x38] sm:$0xf] %v1410
          %1475 = vst [vmem:[%s251 + $0x3c] sm:$0xf] %v1411
          %1476 = vst [vmem:[%s251 + $0x40] sm:$0xf] %v1412
          %1477 = vst [vmem:[%s251 + $0x44] sm:$0xf] %v1413
          %1478 = vst [vmem:[%s251 + $0x48] sm:$0xf] %v1414
          %1479 = vst [vmem:[%s251 + $0x4c] sm:$0xf] %v1415
          %1480 = vst [vmem:[%s251 + $0x50] sm:$0xf] %v1416
          %1481 = vst [vmem:[%s251 + $0x54] sm:$0xf] %v1417
          %1482 = vst [vmem:[%s251 + $0x58] sm:$0xf] %v1418
          %1483 = vst [vmem:[%s251 + $0x5c] sm:$0xf] %v1419
          %1484 = vst [vmem:[%s251 + $0x60] sm:$0xf] %v1420
          %1485 = vst [vmem:[%s251 + $0x64] sm:$0xf] %v1421
          %1486 = vst [vmem:[%s251 + $0x68] sm:$0xf] %v1422
          %1487 = vst [vmem:[%s251 + $0x6c] sm:$0xf] %v1423
          %1488 = vst [vmem:[%s251 + $0x70] sm:$0xf] %v1424
          %1489 = vst [vmem:[%s251 + $0x74] sm:$0xf] %v1425
          %1490 = vst [vmem:[%s251 + $0x78] sm:$0xf] %v1426
          %1491 = vst [vmem:[%s251 + $0x7c] sm:$0xf] %v1427
        $region48: #{tpu_custom_call.1} parent=31 // pred_fallthru
          _
        %s1492 = sand.u32 %s132, 1
        %s1493 = scalar_lea.sflag [#allocation5], %s1492
        %s1494 = sand.u32 %s132, 1
        %s1495 = smul.addr %s1494, 128
        %s1496 = scalar_lea.vmem [#allocation8], %s1495
        // Predicated region
        $region49: #{tpu_custom_call.1} parent=31 // pred_check
          %p1497 = pneg %p142
        $region50: #{tpu_custom_call.1} parent=31 // pred_check_branch
          %1499 = sbr.rel (%p1497) target = $region52
        $region51: #{tpu_custom_call.1} parent=31 // pred_region
          %s1500 = smul.u32 32, %s26
          %s1502 = ssub.s32 2048, 2048
          %1503 = vsyncadd %s1493, %s1502
          %s1504 = sadd.s32 %s27, %s1500
          %s1505 = smul.addr %s1504, 64
          %s1506 = scalar_lea.hbm %s3, %s1505
          %s1507 = sshll.u32 %s1496, 4
          %s1508 = int_to_ptr.vmem [resolvable:$true] %s1507
          %1513 = dma.vmem_to_hbm [thread:$0]  %s1508, 2048, %s1506, %s1493, 64, 64, 4
        $region52: #{tpu_custom_call.1} parent=31 // pred_fallthru
          _
      $region32: #{tpu_custom_call.1} parent=5 // pred_fallthru
        _
      %p1514 = scmp.le.s32.totalorder 2, %s16
      // Predicated region
      $region53: #{tpu_custom_call.1} parent=5 // pred_check
        %p1515 = pneg %p1514
      $region54: #{tpu_custom_call.1} parent=5 // pred_check_branch
        %1517 = sbr.rel (%p1515) target = $region56
      $region55: #{tpu_custom_call.1} parent=5 // pred_region
        %s1518 = ssub.s32 %s16, 2
        // Predicated region
        $region57: #{tpu_custom_call.1} parent=55 // pred_check
          %p1519 = pneg %p148
        $region58: #{tpu_custom_call.1} parent=55 // pred_check_branch
          %1521 = sbr.rel (%p1519) target = $region60
        $region59: #{tpu_custom_call.1} parent=55 // pred_region
          %s1522 = sand.u32 %s133, 1
          %s1523 = scalar_lea.sflag [#allocation5], %s1522
          %s1524 = sand.u32 %s133, 1
          %s1525 = smul.addr %s1524, 128
          %s1526 = scalar_lea.vmem [#allocation8], %s1525
          %1527 = dma.done %s1523, 2048
        $region60: #{tpu_custom_call.1} parent=55 // pred_fallthru
          _
      $region56: #{tpu_custom_call.1} parent=5 // pred_fallthru
        _
    $region6: #{tpu_custom_call.1} parent=1 // loop_footer
      %s20 = sadd.s32 1, %s16
    $region7: #{tpu_custom_call.1} parent=1 // loop_footer_branch
      %15 = sbr.rel target = $region3
    $region8: #{tpu_custom_call.1} parent=1 // loop_exit
      _
    %1528 = vsyncpa [#allocation4], 1
    %s1529 = scalar_lea.sflag [#allocation4], 1
    %1530 = vsyncpa %s1529, 1
    %1531 = vsyncpa [#allocation7], 1
    %1532 = vsyncpa [#allocation5], 1
    %s1533 = scalar_lea.sflag [#allocation5], 1
    %1534 = vsyncpa %s1533, 1

</llo_original>
